<compile_context>
chip_gen: v5e
topology: v5e:2x2
jax: 0.10.0
libtpu: 0.0.40
codegen_flags: <defaults>
</compile_context>

<pallas_src>
import functools
import math

import jax
import jax.numpy as jnp
from jax.experimental import pallas as pl
from jax.experimental.pallas import tpu as pltpu


# ---------------------------------------------------------------------------
# small in-kernel helpers
# ---------------------------------------------------------------------------

_SQRT_HALF = 0.7071067811865476


def _layernorm(x, g, b, eps=1e-5):
    mu = jnp.mean(x, axis=-1, keepdims=True)
    var = jnp.mean((x - mu) ** 2, axis=-1, keepdims=True)
    return (x - mu) * jax.lax.rsqrt(var + eps) * g + b


def gelu_exact(x):
    # exact erf-based GELU (nn.GELU default)
    return 0.5 * x * (1.0 + jax.lax.erf(x * _SQRT_HALF))


def _softmax_last(s):
    # exact softmax (divide, not approx reciprocal) to match the PyTorch reference bit-closely
    s = s - jnp.max(s, axis=-1, keepdims=True)
    p = jnp.exp(s)
    return p / jnp.sum(p, axis=-1, keepdims=True)


# ---------------------------------------------------------------------------
# erf-in-kernel capability probe (exact numerics either way)
# ---------------------------------------------------------------------------

def _erf_probe_kernel(x_ref, o_ref):
    o_ref[...] = jax.lax.erf(x_ref[...])


_ERF_OK = None


def erf_in_kernel_ok():
    global _ERF_OK
    if _ERF_OK is None:
        try:
            y = pl.pallas_call(
                _erf_probe_kernel,
                out_shape=jax.ShapeDtypeStruct((8, 128), jnp.float32),
            )(jnp.zeros((8, 128), jnp.float32))
            jax.block_until_ready(y)
            _ERF_OK = True
        except Exception:
            _ERF_OK = False
    return _ERF_OK


# ---------------------------------------------------------------------------
# Kernel A: fused AnyAttention  (pos-add + 3x LN + QKV proj + MHA + proj + residual)
# ---------------------------------------------------------------------------

def _any_attn_kernel(*refs, num_heads, scale, has_qpos, has_kpos):
    it = iter(refs)
    q_ref = next(it)
    qpos_ref = next(it) if has_qpos else None
    kv_ref = next(it)
    kpos_ref = next(it) if has_kpos else None
    ln_ref = next(it)        # (6, C): [gq, bq, gk, bk, gv, bv]
    w_qkv_ref = next(it)     # (C, 3C) pre-transposed [to_q | to_k | to_v]
    w_o_ref = next(it)       # (C, C)  pre-transposed
    b_o_ref = next(it)       # (1, C)
    o_ref = next(it)

    q_raw = q_ref[0]                       # (Lq, C)
    kv = kv_ref[0]                         # (Lk, C)
    q_in = q_raw + qpos_ref[...] if has_qpos else q_raw
    k_in = kv + kpos_ref[...] if has_kpos else kv

    lnp = ln_ref[...]
    qn = _layernorm(q_in, lnp[0:1], lnp[1:2])
    kn = _layernorm(k_in, lnp[2:3], lnp[3:4])
    vn = _layernorm(kv, lnp[4:5], lnp[5:6])

    w_qkv = w_qkv_ref[...]
    C = q_raw.shape[-1]
    d = C // num_heads
    q_p = jnp.dot(qn, w_qkv[:, 0:C], preferred_element_type=jnp.float32)
    k_p = jnp.dot(kn, w_qkv[:, C:2 * C], preferred_element_type=jnp.float32)
    v_p = jnp.dot(vn, w_qkv[:, 2 * C:3 * C], preferred_element_type=jnp.float32)

    w_o = w_o_ref[...]
    acc = None
    for hh in range(num_heads):            # static unroll; all ops stay 2-D in VMEM
        sl = slice(hh * d, (hh + 1) * d)
        s = jax.lax.dot_general(q_p[:, sl], k_p[:, sl], (((1,), (1,)), ((), ())),
                                preferred_element_type=jnp.float32) * scale
        p = _softmax_last(s)
        oh = jnp.dot(p, v_p[:, sl], preferred_element_type=jnp.float32)        # (Lq, d)
        contrib = jnp.dot(oh, w_o[sl, :], preferred_element_type=jnp.float32)  # (Lq, C)
        acc = contrib if acc is None else acc + contrib
    o_ref[0] = q_raw + acc + b_o_ref[...]


def any_attention_p(q, kv, p, *, num_heads, qpos=None, kpos=None):
    """out = q + Proj(MHA(LN_q(q + qpos), LN_k(kv + kpos), LN_v(kv)))  per batch."""
    B, Lq, C = q.shape
    Lk = kv.shape[1]
    scale = (C / num_heads) ** (-0.5)

    def cspec(a):
        return pl.BlockSpec(a.shape, lambda i, _nd=a.ndim: (0,) * _nd)

    inputs = [q]
    in_specs = [pl.BlockSpec((1, Lq, C), lambda i: (i, 0, 0))]
    if qpos is not None:
        inputs.append(qpos)
        in_specs.append(cspec(qpos))
    inputs.append(kv)
    in_specs.append(pl.BlockSpec((1, Lk, C), lambda i: (i, 0, 0)))
    if kpos is not None:
        inputs.append(kpos)
        in_specs.append(cspec(kpos))
    for a in (p["ln"], p["w_qkv"], p["w_o"], p["b_o"]):
        inputs.append(a)
        in_specs.append(cspec(a))

    return pl.pallas_call(
        functools.partial(_any_attn_kernel, num_heads=num_heads, scale=scale,
                          has_qpos=qpos is not None, has_kpos=kpos is not None),
        out_shape=jax.ShapeDtypeStruct((B, Lq, C), jnp.float32),
        grid=(B,),
        in_specs=in_specs,
        out_specs=pl.BlockSpec((1, Lq, C), lambda i: (i, 0, 0)),
        compiler_params=pltpu.CompilerParams(dimension_semantics=("parallel",)),
    )(*inputs)


# ---------------------------------------------------------------------------
# Kernel B: fused MLP ([reasoning | pre-norm] + LN + fc1 + GELU + fc2 + residual [+ GELU])
# ---------------------------------------------------------------------------

def _mlp_kernel(*refs, has_prenorm, has_reason, post_gelu):
    it = iter(refs)
    x_ref = next(it)
    pre_ref = next(it) if has_prenorm else None
    rln_ref = next(it) if has_reason else None
    wr_ref = next(it) if has_reason else None
    ln_ref = next(it)
    w1_ref = next(it)
    b1_ref = next(it)
    w2_ref = next(it)
    b2_ref = next(it)
    o_ref = next(it)

    x = x_ref[...]
    if has_reason:   # SimpleReasoning: x + LN(x) @ Wr   (1x1 conv, no bias)
        rp = rln_ref[...]
        x = x + jnp.dot(_layernorm(x, rp[0:1], rp[1:2]), wr_ref[...],
                        preferred_element_type=jnp.float32)
    base = x
    if has_prenorm:  # extra outer LayerNorm (norm_layer) applied before the Mlp
        pp = pre_ref[...]
        x = _layernorm(x, pp[0:1], pp[1:2])
    lp = ln_ref[...]
    h = _layernorm(x, lp[0:1], lp[1:2])
    h = jnp.dot(h, w1_ref[...], preferred_element_type=jnp.float32) + b1_ref[...]
    h = gelu_exact(h)
    h = jnp.dot(h, w2_ref[...], preferred_element_type=jnp.float32) + b2_ref[...]
    out = base + h
    if post_gelu:    # fused trailing self.act_layer (decoder output GELU)
        out = gelu_exact(out)
    o_ref[...] = out


def _mlp_front_kernel(*refs, has_prenorm, has_reason):
    # fallback (erf not lowerable in Mosaic): everything up to fc1, plus residual base
    it = iter(refs)
    x_ref = next(it)
    pre_ref = next(it) if has_prenorm else None
    rln_ref = next(it) if has_reason else None
    wr_ref = next(it) if has_reason else None
    ln_ref = next(it)
    w1_ref = next(it)
    b1_ref = next(it)
    base_ref = next(it)
    h_ref = next(it)

    x = x_ref[...]
    if has_reason:
        rp = rln_ref[...]
        x = x + jnp.dot(_layernorm(x, rp[0:1], rp[1:2]), wr_ref[...],
                        preferred_element_type=jnp.float32)
    base = x
    if has_prenorm:
        pp = pre_ref[...]
        x = _layernorm(x, pp[0:1], pp[1:2])
    lp = ln_ref[...]
    h = _layernorm(x, lp[0:1], lp[1:2])
    h = jnp.dot(h, w1_ref[...], preferred_element_type=jnp.float32) + b1_ref[...]
    base_ref[...] = base
    h_ref[...] = h


def _mlp_back_kernel(base_ref, a_ref, w2_ref, b2_ref, o_ref):
    o_ref[...] = base_ref[...] + jnp.dot(a_ref[...], w2_ref[...],
                                         preferred_element_type=jnp.float32) + b2_ref[...]


def mlp_p(x, p, *, prenorm=None, reason=None, post_gelu=False):
    shape = x.shape
    C = shape[-1]
    x2 = x.reshape(-1, C)
    M = x2.shape[0]
    bm = M // 2 if (M % 16 == 0) else M      # 2 parallel row blocks when possible (v7x 2 TCs)
    gm = M // bm
    hidden = p["w1"].shape[1]
    has_pre = prenorm is not None
    has_rea = reason is not None

    row_spec = pl.BlockSpec((bm, C), lambda i: (i, 0))

    def cspec(a):
        return pl.BlockSpec(a.shape, lambda i, _nd=a.ndim: (0,) * _nd)

    prefix_in = [x2]
    prefix_specs = [row_spec]
    consts = (((prenorm,) if has_pre else ()) + (tuple(reason) if has_rea else ())
              + (p["ln"], p["w1"], p["b1"]))
    for a in consts:
        prefix_in.append(a)
        prefix_specs.append(cspec(a))

    cparams = pltpu.CompilerParams(dimension_semantics=("parallel",))

    if erf_in_kernel_ok():
        out = pl.pallas_call(
            functools.partial(_mlp_kernel, has_prenorm=has_pre, has_reason=has_rea,
                              post_gelu=post_gelu),
            out_shape=jax.ShapeDtypeStruct((M, C), jnp.float32),
            grid=(gm,),
            in_specs=prefix_specs + [cspec(p["w2"]), cspec(p["b2"])],
            out_specs=row_spec,
            compiler_params=cparams,
        )(*prefix_in, p["w2"], p["b2"])
    else:
        # TODO(synk): Mosaic erf lowering unavailable on this build -> keep the exact
        # erf-GELU in plain JAX between a front and a back Pallas kernel.
        base, h1 = pl.pallas_call(
            functools.partial(_mlp_front_kernel, has_prenorm=has_pre, has_reason=has_rea),
            out_shape=(jax.ShapeDtypeStruct((M, C), jnp.float32),
                       jax.ShapeDtypeStruct((M, hidden), jnp.float32)),
            grid=(gm,),
            in_specs=prefix_specs,
            out_specs=(row_spec, pl.BlockSpec((bm, hidden), lambda i: (i, 0))),
            compiler_params=cparams,
        )(*prefix_in)
        a = gelu_exact(h1)
        out = pl.pallas_call(
            _mlp_back_kernel,
            out_shape=jax.ShapeDtypeStruct((M, C), jnp.float32),
            grid=(gm,),
            in_specs=[row_spec, pl.BlockSpec((bm, hidden), lambda i: (i, 0)),
                      cspec(p["w2"]), cspec(p["b2"])],
            out_specs=row_spec,
            compiler_params=cparams,
        )(base, a, p["w2"], p["b2"])
        if post_gelu:
            out = gelu_exact(out)
    return out.reshape(shape)


# ---------------------------------------------------------------------------
# Kernel C: fused nn.MultiheadAttention self-attention (+ residual)
# ---------------------------------------------------------------------------

def _mhsa_kernel(*refs, num_heads, res_is_input):
    it = iter(refs)
    x_ref = next(it)                               # (bb, L, E), attention batch leading
    res_ref = x_ref if res_is_input else next(it)  # residual base
    w_in_ref = next(it)                            # (E, 3E)
    b_in_ref = next(it)                            # (1, 3E)
    w_out_ref = next(it)                           # (E, E)
    b_out_ref = next(it)                           # (1, E)
    o_ref = next(it)

    w_in = w_in_ref[...]
    b_in = b_in_ref[...]
    w_out = w_out_ref[...]
    b_out = b_out_ref[...]
    bb, L, E = x_ref.shape
    d = E // num_heads
    scale = 1.0 / math.sqrt(d)

    for b in range(bb):                            # static unroll over in-block batch
        x_b = x_ref[b]                             # (L, E)
        qkv = jnp.dot(x_b, w_in, preferred_element_type=jnp.float32) + b_in   # (L, 3E)
        acc = None
        for hh in range(num_heads):
            qh = qkv[:, hh * d:(hh + 1) * d]
            kh = qkv[:, E + hh * d:E + (hh + 1) * d]
            vh = qkv[:, 2 * E + hh * d:2 * E + (hh + 1) * d]
            s = jax.lax.dot_general(qh, kh, (((1,), (1,)), ((), ())),
                                    preferred_element_type=jnp.float32) * scale
            p = _softmax_last(s)
            oh = jnp.dot(p, vh, preferred_element_type=jnp.float32)                 # (L, d)
            contrib = jnp.dot(oh, w_out[hh * d:(hh + 1) * d, :],
                              preferred_element_type=jnp.float32)                   # (L, E)
            acc = contrib if acc is None else acc + contrib
        o_ref[b] = res_ref[b] + acc + b_out


def mha_p(x, p, *, num_heads, residual=None):
    """x: (N, L, E) with the attention-batch axis leading. out = residual + MHSA(x)."""
    N, L, E = x.shape
    bb = 4 if (N % 4 == 0 and N >= 4) else 1
    blk = pl.BlockSpec((bb, L, E), lambda i: (i, 0, 0))

    def cspec(a):
        return pl.BlockSpec(a.shape, lambda i, _nd=a.ndim: (0,) * _nd)

    inputs = [x]
    in_specs = [blk]
    if residual is not None:
        inputs.append(residual)
        in_specs.append(blk)
    for a in (p["w_in"], p["b_in"], p["w_out"], p["b_out"]):
        inputs.append(a)
        in_specs.append(cspec(a))

    return pl.pallas_call(
        functools.partial(_mhsa_kernel, num_heads=num_heads,
                          res_is_input=residual is None),
        out_shape=jax.ShapeDtypeStruct((N, L, E), jnp.float32),
        grid=(N // bb,),
        in_specs=in_specs,
        out_specs=blk,
        compiler_params=pltpu.CompilerParams(dimension_semantics=("parallel",)),
    )(*inputs)


# ---------------------------------------------------------------------------
# Module forward (thin plain-JAX glue around the fused kernels)
# ---------------------------------------------------------------------------

def forward(params, x_list, y=None, num_heads=4):
    x0 = x_list[0]
    b, c, h, w = x0.shape
    x_seq = jnp.transpose(x0, (0, 2, 3, 1)).reshape(b, h * w, c)          # b (h w) c

    P = params["rpn_tokens"].shape[1]
    hd = c // num_heads
    parts = jnp.broadcast_to(params["rpn_tokens"], (b, P, c))
    # apply_pos broadcasts (1,P,1,hd) over batch and heads -> flat (P, C) add
    qpos_flat = jnp.broadcast_to(params["rpn_qpos"].reshape(P, 1, hd),
                                 (P, num_heads, hd)).reshape(P, c)
    kpos_flat = jnp.broadcast_to(params["rpn_kpos"].reshape(P, 1, hd),
                                 (P, num_heads, hd)).reshape(P, c)

    # ----- Encoder (task 0): parts = parts + attn; reasoning; parts = parts + ffn -----
    enc = params["encoder1"]
    parts = any_attention_p(parts, x_seq, enc["enc_attn"],
                            num_heads=num_heads, qpos=qpos_flat)
    parts = mlp_p(parts, enc["enc_ffn"], reason=(enc["reason_ln"], enc["reason_w"]))

    # ----- cross-task MHSA + ffn (task_num=1) -----
    # torch permutes to (N, B, C) seq-first for nn.MultiheadAttention; in batch-first
    # form this is exactly self-attention over the parts axis per batch.
    parts = mha_p(parts, params["mhsa_1"], num_heads=num_heads)
    parts = mlp_p(parts, params["ffn_mlp"], prenorm=params["norm_layer"])
    # torch.split(..., 64, dim=1)[0] == whole tensor (P <= 64)

    # ----- Decoder (task 0) -----
    dec = params["decoder1"]
    out = any_attention_p(x_seq, parts, dec["attn1"],
                          num_heads=num_heads, kpos=kpos_flat)             # x + attn1
    out = mlp_p(out, dec["ffn1"])                                          # + ffn1
    # nn.MultiheadAttention called on a (B, L, C) tensor with batch_first=False:
    # dim0 (B) is the sequence and dim1 (L) is the batch — reproduced verbatim.
    out_t = jnp.transpose(out, (1, 0, 2))                                  # (L, B, C)
    res_t = jnp.transpose(x_seq, (1, 0, 2))
    outs_t = mha_p(out_t, dec["mhsa"], num_heads=num_heads, residual=res_t)  # x + mhsa(out)
    outs = jnp.transpose(outs_t, (1, 0, 2))
    outs = mlp_p(outs, dec["ffn2"], post_gelu=True)                        # + ffn2, then act_layer

    feats = jnp.transpose(outs.reshape(b, h, w, c), (0, 3, 1, 2))
    return [feats]


# ---------------------------------------------------------------------------
# Deterministic synthetic parameters (weights already stored as (in, out);
# a torch checkpoint would be transposed once at load time)
# ---------------------------------------------------------------------------

def init_params(key, dim, num_heads, num_parts, ffn_exp=3):
    keys = iter(jax.random.split(key, 64))

    def nrm(shape, std=0.02):
        return jax.random.normal(next(keys), shape, jnp.float32) * std

    def ln_pack(n_norms=1):
        rows = []
        for _ in range(n_norms):
            rows.append(jnp.ones((1, dim), jnp.float32))   # gamma
            rows.append(jnp.zeros((1, dim), jnp.float32))  # beta
        return jnp.concatenate(rows, axis=0)

    def any_attn():
        return {"ln": ln_pack(3),                      # [gq,bq, gk,bk, gv,bv]
                "w_qkv": nrm((dim, 3 * dim)),          # [to_q | to_k | to_v], qkv_bias=False
                "w_o": nrm((dim, dim)),
                "b_o": nrm((1, dim))}

    def mlp(hidden):
        return {"ln": ln_pack(1),
                "w1": nrm((dim, hidden)), "b1": nrm((1, hidden)),
                "w2": nrm((hidden, dim)), "b2": nrm((1, dim))}

    def mha():
        return {"w_in": nrm((dim, 3 * dim)), "b_in": nrm((1, 3 * dim)),
                "w_out": nrm((dim, dim)), "b_out": nrm((1, dim))}

    head_dim = dim // num_heads
    return {
        "rpn_tokens": nrm((1, num_parts, dim)),
        "rpn_qpos": nrm((1, num_parts, 1, head_dim)),
        "rpn_kpos": nrm((1, num_parts, 1, head_dim)),
        "encoder1": {"enc_attn": any_attn(), "reason_ln": ln_pack(1),
                     "reason_w": nrm((dim, dim)), "enc_ffn": mlp(dim)},
        "decoder1": {"attn1": any_attn(), "ffn1": mlp(dim * ffn_exp),
                     "ffn2": mlp(dim * ffn_exp), "mhsa": mha()},
        "mhsa_1": mha(),
        "norm_layer": ln_pack(1),
        "ffn_mlp": mlp(dim),
    }


if __name__ == "__main__":
    B, C, H, W = 2, 32, 4, 4        # embed_dims=32 (small), spatial 4x4
    NUM_HEADS = 4
    NUM_PARTS = 8

    key = jax.random.PRNGKey(0)
    kx, kp = jax.random.split(key)
    x = jax.random.normal(kx, (B, C, H, W), jnp.float32)
    params = init_params(kp, C, NUM_HEADS, NUM_PARTS)

    feats_list = forward(params, [x], y=None, num_heads=NUM_HEADS)
    out = jax.block_until_ready(feats_list[0])

    assert out.shape == (B, C, H, W), out.shape
    assert bool(jnp.isfinite(out).all())
    print("KERNEL_OK")
</pallas_src>

<mosaic_0001>
module attributes {stable_mosaic.version = 11 : i64} {
  func.func @_any_attn_kernel(%arg0: i32, %arg1: memref<1x8x32xf32, #tpu.memory_space<vmem>>, %arg2: memref<8x32xf32, #tpu.memory_space<vmem>>, %arg3: memref<1x16x32xf32, #tpu.memory_space<vmem>>, %arg4: memref<6x32xf32, #tpu.memory_space<vmem>>, %arg5: memref<32x96xf32, #tpu.memory_space<vmem>>, %arg6: memref<32x32xf32, #tpu.memory_space<vmem>>, %arg7: memref<1x32xf32, #tpu.memory_space<vmem>>, %arg8: memref<1x8x32xf32, #tpu.memory_space<vmem>>) attributes {dimension_semantics = [#tpu.dimension_semantics<parallel>], iteration_bounds = array<i64: 2>, scalar_prefetch = 0 : i64, scratch_operands = 0 : i64, tpu.core_type = #tpu.core_type<tc>, window_params = [{transform_indices = @transform_0, window_bounds = array<i64: 1, 8, 32>}, {pipeline_mode = #tpu.pipeline_mode<synchronous>, transform_indices = @transform_1, window_bounds = array<i64: 8, 32>}, {transform_indices = @transform_2, window_bounds = array<i64: 1, 16, 32>}, {pipeline_mode = #tpu.pipeline_mode<synchronous>, transform_indices = @transform_3, window_bounds = array<i64: 6, 32>}, {pipeline_mode = #tpu.pipeline_mode<synchronous>, transform_indices = @transform_4, window_bounds = array<i64: 32, 96>}, {pipeline_mode = #tpu.pipeline_mode<synchronous>, transform_indices = @transform_5, window_bounds = array<i64: 32, 32>}, {pipeline_mode = #tpu.pipeline_mode<synchronous>, transform_indices = @transform_6, window_bounds = array<i64: 1, 32>}, {transform_indices = @transform_7, window_bounds = array<i64: 1, 8, 32>}]} {
    %c0 = arith.constant 0 : index
    %c0_0 = arith.constant 0 : index
    %c0_1 = arith.constant 0 : index
    %0 = vector.load %arg1[%c0, %c0_0, %c0_1] : memref<1x8x32xf32, #tpu.memory_space<vmem>>, vector<1x8x32xf32>
    %1 = vector.shape_cast %0 : vector<1x8x32xf32> to vector<8x32xf32>
    %c0_2 = arith.constant 0 : index
    %c0_3 = arith.constant 0 : index
    %c0_4 = arith.constant 0 : index
    %2 = vector.load %arg3[%c0_2, %c0_3, %c0_4] : memref<1x16x32xf32, #tpu.memory_space<vmem>>, vector<1x16x32xf32>
    %3 = vector.shape_cast %2 : vector<1x16x32xf32> to vector<16x32xf32>
    %c0_5 = arith.constant 0 : index
    %c0_6 = arith.constant 0 : index
    %4 = vector.load %arg2[%c0_5, %c0_6] : memref<8x32xf32, #tpu.memory_space<vmem>>, vector<8x32xf32>
    %5 = arith.addf %1, %4 : vector<8x32xf32>
    %c0_7 = arith.constant 0 : index
    %c0_8 = arith.constant 0 : index
    %6 = vector.load %arg4[%c0_7, %c0_8] : memref<6x32xf32, #tpu.memory_space<vmem>>, vector<6x32xf32>
    %7 = vector.extract_strided_slice %6 {offsets = [0, 0], sizes = [1, 32], strides = [1, 1]} : vector<6x32xf32> to vector<1x32xf32>
    %8 = vector.extract_strided_slice %6 {offsets = [1, 0], sizes = [1, 32], strides = [1, 1]} : vector<6x32xf32> to vector<1x32xf32>
    %cst = arith.constant dense<0.000000e+00> : vector<8xf32>
    %9 = vector.multi_reduction <add>, %5, %cst [1] : vector<8x32xf32> to vector<8xf32>
    %10 = vector.shape_cast %9 : vector<8xf32> to vector<8x1xf32>
    %cst_9 = arith.constant 3.200000e+01 : f32
    %11 = vector.broadcast %cst_9 : f32 to vector<8x1xf32>
    %12 = arith.divf %10, %11 : vector<8x1xf32>
    %13 = vector.broadcast %12 : vector<8x1xf32> to vector<8x32xf32>
    %14 = arith.subf %5, %13 : vector<8x32xf32>
    %15 = arith.mulf %14, %14 : vector<8x32xf32>
    %cst_10 = arith.constant dense<0.000000e+00> : vector<8xf32>
    %16 = vector.multi_reduction <add>, %15, %cst_10 [1] : vector<8x32xf32> to vector<8xf32>
    %17 = vector.shape_cast %16 : vector<8xf32> to vector<8x1xf32>
    %cst_11 = arith.constant 3.200000e+01 : f32
    %18 = vector.broadcast %cst_11 : f32 to vector<8x1xf32>
    %19 = arith.divf %17, %18 : vector<8x1xf32>
    %20 = vector.broadcast %12 : vector<8x1xf32> to vector<8x32xf32>
    %21 = arith.subf %5, %20 : vector<8x32xf32>
    %cst_12 = arith.constant 9.99999974E-6 : f32
    %22 = vector.broadcast %cst_12 : f32 to vector<8x1xf32>
    %23 = arith.addf %19, %22 : vector<8x1xf32>
    %24 = math.rsqrt %23 : vector<8x1xf32>
    %25 = vector.broadcast %24 : vector<8x1xf32> to vector<8x32xf32>
    %26 = arith.mulf %21, %25 : vector<8x32xf32>
    %27 = vector.broadcast %7 : vector<1x32xf32> to vector<8x32xf32>
    %28 = arith.mulf %26, %27 : vector<8x32xf32>
    %29 = vector.broadcast %8 : vector<1x32xf32> to vector<8x32xf32>
    %30 = arith.addf %28, %29 : vector<8x32xf32>
    %31 = vector.extract_strided_slice %6 {offsets = [2, 0], sizes = [1, 32], strides = [1, 1]} : vector<6x32xf32> to vector<1x32xf32>
    %32 = vector.extract_strided_slice %6 {offsets = [3, 0], sizes = [1, 32], strides = [1, 1]} : vector<6x32xf32> to vector<1x32xf32>
    %cst_13 = arith.constant dense<0.000000e+00> : vector<16xf32>
    %33 = vector.multi_reduction <add>, %3, %cst_13 [1] : vector<16x32xf32> to vector<16xf32>
    %34 = vector.shape_cast %33 : vector<16xf32> to vector<16x1xf32>
    %cst_14 = arith.constant 3.200000e+01 : f32
    %35 = vector.broadcast %cst_14 : f32 to vector<16x1xf32>
    %36 = arith.divf %34, %35 : vector<16x1xf32>
    %37 = vector.broadcast %36 : vector<16x1xf32> to vector<16x32xf32>
    %38 = arith.subf %3, %37 : vector<16x32xf32>
    %39 = arith.mulf %38, %38 : vector<16x32xf32>
    %cst_15 = arith.constant dense<0.000000e+00> : vector<16xf32>
    %40 = vector.multi_reduction <add>, %39, %cst_15 [1] : vector<16x32xf32> to vector<16xf32>
    %41 = vector.shape_cast %40 : vector<16xf32> to vector<16x1xf32>
    %cst_16 = arith.constant 3.200000e+01 : f32
    %42 = vector.broadcast %cst_16 : f32 to vector<16x1xf32>
    %43 = arith.divf %41, %42 : vector<16x1xf32>
    %44 = vector.broadcast %36 : vector<16x1xf32> to vector<16x32xf32>
    %45 = arith.subf %3, %44 : vector<16x32xf32>
    %cst_17 = arith.constant 9.99999974E-6 : f32
    %46 = vector.broadcast %cst_17 : f32 to vector<16x1xf32>
    %47 = arith.addf %43, %46 : vector<16x1xf32>
    %48 = math.rsqrt %47 : vector<16x1xf32>
    %49 = vector.broadcast %48 : vector<16x1xf32> to vector<16x32xf32>
    %50 = arith.mulf %45, %49 : vector<16x32xf32>
    %51 = vector.broadcast %31 : vector<1x32xf32> to vector<16x32xf32>
    %52 = arith.mulf %50, %51 : vector<16x32xf32>
    %53 = vector.broadcast %32 : vector<1x32xf32> to vector<16x32xf32>
    %54 = arith.addf %52, %53 : vector<16x32xf32>
    %55 = vector.extract_strided_slice %6 {offsets = [4, 0], sizes = [1, 32], strides = [1, 1]} : vector<6x32xf32> to vector<1x32xf32>
    %56 = vector.extract_strided_slice %6 {offsets = [5, 0], sizes = [1, 32], strides = [1, 1]} : vector<6x32xf32> to vector<1x32xf32>
    %cst_18 = arith.constant dense<0.000000e+00> : vector<16xf32>
    %57 = vector.multi_reduction <add>, %3, %cst_18 [1] : vector<16x32xf32> to vector<16xf32>
    %58 = vector.shape_cast %57 : vector<16xf32> to vector<16x1xf32>
    %cst_19 = arith.constant 3.200000e+01 : f32
    %59 = vector.broadcast %cst_19 : f32 to vector<16x1xf32>
    %60 = arith.divf %58, %59 : vector<16x1xf32>
    %61 = vector.broadcast %60 : vector<16x1xf32> to vector<16x32xf32>
    %62 = arith.subf %3, %61 : vector<16x32xf32>
    %63 = arith.mulf %62, %62 : vector<16x32xf32>
    %cst_20 = arith.constant dense<0.000000e+00> : vector<16xf32>
    %64 = vector.multi_reduction <add>, %63, %cst_20 [1] : vector<16x32xf32> to vector<16xf32>
    %65 = vector.shape_cast %64 : vector<16xf32> to vector<16x1xf32>
    %cst_21 = arith.constant 3.200000e+01 : f32
    %66 = vector.broadcast %cst_21 : f32 to vector<16x1xf32>
    %67 = arith.divf %65, %66 : vector<16x1xf32>
    %68 = vector.broadcast %60 : vector<16x1xf32> to vector<16x32xf32>
    %69 = arith.subf %3, %68 : vector<16x32xf32>
    %cst_22 = arith.constant 9.99999974E-6 : f32
    %70 = vector.broadcast %cst_22 : f32 to vector<16x1xf32>
    %71 = arith.addf %67, %70 : vector<16x1xf32>
    %72 = math.rsqrt %71 : vector<16x1xf32>
    %73 = vector.broadcast %72 : vector<16x1xf32> to vector<16x32xf32>
    %74 = arith.mulf %69, %73 : vector<16x32xf32>
    %75 = vector.broadcast %55 : vector<1x32xf32> to vector<16x32xf32>
    %76 = arith.mulf %74, %75 : vector<16x32xf32>
    %77 = vector.broadcast %56 : vector<1x32xf32> to vector<16x32xf32>
    %78 = arith.addf %76, %77 : vector<16x32xf32>
    %c0_23 = arith.constant 0 : index
    %c0_24 = arith.constant 0 : index
    %79 = vector.load %arg5[%c0_23, %c0_24] : memref<32x96xf32, #tpu.memory_space<vmem>>, vector<32x96xf32>
    %80 = vector.extract_strided_slice %79 {offsets = [0, 0], sizes = [32, 32], strides = [1, 1]} : vector<32x96xf32> to vector<32x32xf32>
    %cst_25 = arith.constant dense<0.000000e+00> : vector<8x32xf32>
    %81 = tpu.matmul %30, %80, %cst_25 {dimension_numbers = #tpu.dot_dimension_numbers<[1], [0], [0], [1], [0, 0, 1, 1], [], []>} : vector<8x32xf32>, vector<32x32xf32>, vector<8x32xf32> -> vector<8x32xf32>
    %82 = vector.extract_strided_slice %79 {offsets = [0, 32], sizes = [32, 32], strides = [1, 1]} : vector<32x96xf32> to vector<32x32xf32>
    %cst_26 = arith.constant dense<0.000000e+00> : vector<16x32xf32>
    %83 = tpu.matmul %54, %82, %cst_26 {dimension_numbers = #tpu.dot_dimension_numbers<[1], [0], [0], [1], [0, 0, 1, 1], [], []>} : vector<16x32xf32>, vector<32x32xf32>, vector<16x32xf32> -> vector<16x32xf32>
    %84 = vector.extract_strided_slice %79 {offsets = [0, 64], sizes = [32, 32], strides = [1, 1]} : vector<32x96xf32> to vector<32x32xf32>
    %cst_27 = arith.constant dense<0.000000e+00> : vector<16x32xf32>
    %85 = tpu.matmul %78, %84, %cst_27 {dimension_numbers = #tpu.dot_dimension_numbers<[1], [0], [0], [1], [0, 0, 1, 1], [], []>} : vector<16x32xf32>, vector<32x32xf32>, vector<16x32xf32> -> vector<16x32xf32>
    %c0_28 = arith.constant 0 : index
    %c0_29 = arith.constant 0 : index
    %86 = vector.load %arg6[%c0_28, %c0_29] : memref<32x32xf32, #tpu.memory_space<vmem>>, vector<32x32xf32>
    %87 = vector.extract_strided_slice %81 {offsets = [0, 0], sizes = [8, 8], strides = [1, 1]} : vector<8x32xf32> to vector<8x8xf32>
    %88 = vector.extract_strided_slice %83 {offsets = [0, 0], sizes = [16, 8], strides = [1, 1]} : vector<16x32xf32> to vector<16x8xf32>
    %cst_30 = arith.constant dense<0.000000e+00> : vector<8x16xf32>
    %89 = tpu.matmul %87, %88, %cst_30 {dimension_numbers = #tpu.dot_dimension_numbers<[1], [1], [0], [0], [0, 0, 1, 0], [], []>} : vector<8x8xf32>, vector<16x8xf32>, vector<8x16xf32> -> vector<8x16xf32>
    %cst_31 = arith.constant 0.353553385 : f32
    %90 = vector.broadcast %cst_31 : f32 to vector<8x16xf32>
    %91 = arith.mulf %89, %90 : vector<8x16xf32>
    %cst_32 = arith.constant dense<0xFF800000> : vector<8xf32>
    %92 = vector.multi_reduction <maximumf>, %91, %cst_32 [1] : vector<8x16xf32> to vector<8xf32>
    %93 = vector.shape_cast %92 : vector<8xf32> to vector<8x1xf32>
    %94 = vector.broadcast %93 : vector<8x1xf32> to vector<8x16xf32>
    %95 = arith.subf %91, %94 : vector<8x16xf32>
    %96 = math.exp %95 : vector<8x16xf32>
    %cst_33 = arith.constant dense<0.000000e+00> : vector<8xf32>
    %97 = vector.multi_reduction <add>, %96, %cst_33 [1] : vector<8x16xf32> to vector<8xf32>
    %98 = vector.shape_cast %97 : vector<8xf32> to vector<8x1xf32>
    %99 = vector.broadcast %98 : vector<8x1xf32> to vector<8x16xf32>
    %100 = arith.divf %96, %99 : vector<8x16xf32>
    %101 = vector.extract_strided_slice %85 {offsets = [0, 0], sizes = [16, 8], strides = [1, 1]} : vector<16x32xf32> to vector<16x8xf32>
    %cst_34 = arith.constant dense<0.000000e+00> : vector<8x8xf32>
    %102 = tpu.matmul %100, %101, %cst_34 {dimension_numbers = #tpu.dot_dimension_numbers<[1], [0], [0], [1], [0, 0, 1, 1], [], []>} : vector<8x16xf32>, vector<16x8xf32>, vector<8x8xf32> -> vector<8x8xf32>
    %103 = vector.extract_strided_slice %86 {offsets = [0, 0], sizes = [8, 32], strides = [1, 1]} : vector<32x32xf32> to vector<8x32xf32>
    %cst_35 = arith.constant dense<0.000000e+00> : vector<8x32xf32>
    %104 = tpu.matmul %102, %103, %cst_35 {dimension_numbers = #tpu.dot_dimension_numbers<[1], [0], [0], [1], [0, 0, 1, 1], [], []>} : vector<8x8xf32>, vector<8x32xf32>, vector<8x32xf32> -> vector<8x32xf32>
    %105 = vector.extract_strided_slice %81 {offsets = [0, 8], sizes = [8, 8], strides = [1, 1]} : vector<8x32xf32> to vector<8x8xf32>
    %106 = vector.extract_strided_slice %83 {offsets = [0, 8], sizes = [16, 8], strides = [1, 1]} : vector<16x32xf32> to vector<16x8xf32>
    %cst_36 = arith.constant dense<0.000000e+00> : vector<8x16xf32>
    %107 = tpu.matmul %105, %106, %cst_36 {dimension_numbers = #tpu.dot_dimension_numbers<[1], [1], [0], [0], [0, 0, 1, 0], [], []>} : vector<8x8xf32>, vector<16x8xf32>, vector<8x16xf32> -> vector<8x16xf32>
    %cst_37 = arith.constant 0.353553385 : f32
    %108 = vector.broadcast %cst_37 : f32 to vector<8x16xf32>
    %109 = arith.mulf %107, %108 : vector<8x16xf32>
    %cst_38 = arith.constant dense<0xFF800000> : vector<8xf32>
    %110 = vector.multi_reduction <maximumf>, %109, %cst_38 [1] : vector<8x16xf32> to vector<8xf32>
    %111 = vector.shape_cast %110 : vector<8xf32> to vector<8x1xf32>
    %112 = vector.broadcast %111 : vector<8x1xf32> to vector<8x16xf32>
    %113 = arith.subf %109, %112 : vector<8x16xf32>
    %114 = math.exp %113 : vector<8x16xf32>
    %cst_39 = arith.constant dense<0.000000e+00> : vector<8xf32>
    %115 = vector.multi_reduction <add>, %114, %cst_39 [1] : vector<8x16xf32> to vector<8xf32>
    %116 = vector.shape_cast %115 : vector<8xf32> to vector<8x1xf32>
    %117 = vector.broadcast %116 : vector<8x1xf32> to vector<8x16xf32>
    %118 = arith.divf %114, %117 : vector<8x16xf32>
    %119 = vector.extract_strided_slice %85 {offsets = [0, 8], sizes = [16, 8], strides = [1, 1]} : vector<16x32xf32> to vector<16x8xf32>
    %cst_40 = arith.constant dense<0.000000e+00> : vector<8x8xf32>
    %120 = tpu.matmul %118, %119, %cst_40 {dimension_numbers = #tpu.dot_dimension_numbers<[1], [0], [0], [1], [0, 0, 1, 1], [], []>} : vector<8x16xf32>, vector<16x8xf32>, vector<8x8xf32> -> vector<8x8xf32>
    %121 = vector.extract_strided_slice %86 {offsets = [8, 0], sizes = [8, 32], strides = [1, 1]} : vector<32x32xf32> to vector<8x32xf32>
    %cst_41 = arith.constant dense<0.000000e+00> : vector<8x32xf32>
    %122 = tpu.matmul %120, %121, %cst_41 {dimension_numbers = #tpu.dot_dimension_numbers<[1], [0], [0], [1], [0, 0, 1, 1], [], []>} : vector<8x8xf32>, vector<8x32xf32>, vector<8x32xf32> -> vector<8x32xf32>
    %123 = arith.addf %104, %122 : vector<8x32xf32>
    %124 = vector.extract_strided_slice %81 {offsets = [0, 16], sizes = [8, 8], strides = [1, 1]} : vector<8x32xf32> to vector<8x8xf32>
    %125 = vector.extract_strided_slice %83 {offsets = [0, 16], sizes = [16, 8], strides = [1, 1]} : vector<16x32xf32> to vector<16x8xf32>
    %cst_42 = arith.constant dense<0.000000e+00> : vector<8x16xf32>
    %126 = tpu.matmul %124, %125, %cst_42 {dimension_numbers = #tpu.dot_dimension_numbers<[1], [1], [0], [0], [0, 0, 1, 0], [], []>} : vector<8x8xf32>, vector<16x8xf32>, vector<8x16xf32> -> vector<8x16xf32>
    %cst_43 = arith.constant 0.353553385 : f32
    %127 = vector.broadcast %cst_43 : f32 to vector<8x16xf32>
    %128 = arith.mulf %126, %127 : vector<8x16xf32>
    %cst_44 = arith.constant dense<0xFF800000> : vector<8xf32>
    %129 = vector.multi_reduction <maximumf>, %128, %cst_44 [1] : vector<8x16xf32> to vector<8xf32>
    %130 = vector.shape_cast %129 : vector<8xf32> to vector<8x1xf32>
    %131 = vector.broadcast %130 : vector<8x1xf32> to vector<8x16xf32>
    %132 = arith.subf %128, %131 : vector<8x16xf32>
    %133 = math.exp %132 : vector<8x16xf32>
    %cst_45 = arith.constant dense<0.000000e+00> : vector<8xf32>
    %134 = vector.multi_reduction <add>, %133, %cst_45 [1] : vector<8x16xf32> to vector<8xf32>
    %135 = vector.shape_cast %134 : vector<8xf32> to vector<8x1xf32>
    %136 = vector.broadcast %135 : vector<8x1xf32> to vector<8x16xf32>
    %137 = arith.divf %133, %136 : vector<8x16xf32>
    %138 = vector.extract_strided_slice %85 {offsets = [0, 16], sizes = [16, 8], strides = [1, 1]} : vector<16x32xf32> to vector<16x8xf32>
    %cst_46 = arith.constant dense<0.000000e+00> : vector<8x8xf32>
    %139 = tpu.matmul %137, %138, %cst_46 {dimension_numbers = #tpu.dot_dimension_numbers<[1], [0], [0], [1], [0, 0, 1, 1], [], []>} : vector<8x16xf32>, vector<16x8xf32>, vector<8x8xf32> -> vector<8x8xf32>
    %140 = vector.extract_strided_slice %86 {offsets = [16, 0], sizes = [8, 32], strides = [1, 1]} : vector<32x32xf32> to vector<8x32xf32>
    %cst_47 = arith.constant dense<0.000000e+00> : vector<8x32xf32>
    %141 = tpu.matmul %139, %140, %cst_47 {dimension_numbers = #tpu.dot_dimension_numbers<[1], [0], [0], [1], [0, 0, 1, 1], [], []>} : vector<8x8xf32>, vector<8x32xf32>, vector<8x32xf32> -> vector<8x32xf32>
    %142 = arith.addf %123, %141 : vector<8x32xf32>
    %143 = vector.extract_strided_slice %81 {offsets = [0, 24], sizes = [8, 8], strides = [1, 1]} : vector<8x32xf32> to vector<8x8xf32>
    %144 = vector.extract_strided_slice %83 {offsets = [0, 24], sizes = [16, 8], strides = [1, 1]} : vector<16x32xf32> to vector<16x8xf32>
    %cst_48 = arith.constant dense<0.000000e+00> : vector<8x16xf32>
    %145 = tpu.matmul %143, %144, %cst_48 {dimension_numbers = #tpu.dot_dimension_numbers<[1], [1], [0], [0], [0, 0, 1, 0], [], []>} : vector<8x8xf32>, vector<16x8xf32>, vector<8x16xf32> -> vector<8x16xf32>
    %cst_49 = arith.constant 0.353553385 : f32
    %146 = vector.broadcast %cst_49 : f32 to vector<8x16xf32>
    %147 = arith.mulf %145, %146 : vector<8x16xf32>
    %cst_50 = arith.constant dense<0xFF800000> : vector<8xf32>
    %148 = vector.multi_reduction <maximumf>, %147, %cst_50 [1] : vector<8x16xf32> to vector<8xf32>
    %149 = vector.shape_cast %148 : vector<8xf32> to vector<8x1xf32>
    %150 = vector.broadcast %149 : vector<8x1xf32> to vector<8x16xf32>
    %151 = arith.subf %147, %150 : vector<8x16xf32>
    %152 = math.exp %151 : vector<8x16xf32>
    %cst_51 = arith.constant dense<0.000000e+00> : vector<8xf32>
    %153 = vector.multi_reduction <add>, %152, %cst_51 [1] : vector<8x16xf32> to vector<8xf32>
    %154 = vector.shape_cast %153 : vector<8xf32> to vector<8x1xf32>
    %155 = vector.broadcast %154 : vector<8x1xf32> to vector<8x16xf32>
    %156 = arith.divf %152, %155 : vector<8x16xf32>
    %157 = vector.extract_strided_slice %85 {offsets = [0, 24], sizes = [16, 8], strides = [1, 1]} : vector<16x32xf32> to vector<16x8xf32>
    %cst_52 = arith.constant dense<0.000000e+00> : vector<8x8xf32>
    %158 = tpu.matmul %156, %157, %cst_52 {dimension_numbers = #tpu.dot_dimension_numbers<[1], [0], [0], [1], [0, 0, 1, 1], [], []>} : vector<8x16xf32>, vector<16x8xf32>, vector<8x8xf32> -> vector<8x8xf32>
    %159 = vector.extract_strided_slice %86 {offsets = [24, 0], sizes = [8, 32], strides = [1, 1]} : vector<32x32xf32> to vector<8x32xf32>
    %cst_53 = arith.constant dense<0.000000e+00> : vector<8x32xf32>
    %160 = tpu.matmul %158, %159, %cst_53 {dimension_numbers = #tpu.dot_dimension_numbers<[1], [0], [0], [1], [0, 0, 1, 1], [], []>} : vector<8x8xf32>, vector<8x32xf32>, vector<8x32xf32> -> vector<8x32xf32>
    %161 = arith.addf %142, %160 : vector<8x32xf32>
    %162 = arith.addf %1, %161 : vector<8x32xf32>
    %c0_54 = arith.constant 0 : index
    %c0_55 = arith.constant 0 : index
    %163 = vector.load %arg7[%c0_54, %c0_55] : memref<1x32xf32, #tpu.memory_space<vmem>>, vector<1x32xf32>
    %164 = vector.broadcast %163 : vector<1x32xf32> to vector<8x32xf32>
    %165 = arith.addf %162, %164 : vector<8x32xf32>
    %c0_56 = arith.constant 0 : index
    %c0_57 = arith.constant 0 : index
    %c0_58 = arith.constant 0 : index
    %166 = vector.load %arg8[%c0_56, %c0_57, %c0_58] : memref<1x8x32xf32, #tpu.memory_space<vmem>>, vector<1x8x32xf32>
    %167 = vector.shape_cast %166 : vector<1x8x32xf32> to vector<8x32xf32>
    %168 = vector.shape_cast %165 : vector<8x32xf32> to vector<1x8x32xf32>
    tpu.vector_store %arg8[%c0_56, %c0_57, %c0_58], %168 {strides = array<i32>} : memref<1x8x32xf32, #tpu.memory_space<vmem>>, vector<1x8x32xf32>,
    return
  }
  func.func @transform_0(%arg0: i32) -> (i32, i32, i32) {
    %c0_i32 = arith.constant 0 : i32
    %c0_i32_0 = arith.constant 0 : i32
    %c0_i32_1 = arith.constant 0 : i32
    return %arg0, %c0_i32, %c0_i32_0 : i32, i32, i32
  }
  func.func @transform_1(%arg0: i32) -> (i32, i32) {
    %c0_i32 = arith.constant 0 : i32
    %c0_i32_0 = arith.constant 0 : i32
    %c0_i32_1 = arith.constant 0 : i32
    return %c0_i32, %c0_i32_0 : i32, i32
  }
  func.func @transform_2(%arg0: i32) -> (i32, i32, i32) {
    %c0_i32 = arith.constant 0 : i32
    %c0_i32_0 = arith.constant 0 : i32
    %c0_i32_1 = arith.constant 0 : i32
    return %arg0, %c0_i32, %c0_i32_0 : i32, i32, i32
  }
  func.func @transform_3(%arg0: i32) -> (i32, i32) {
    %c0_i32 = arith.constant 0 : i32
    %c0_i32_0 = arith.constant 0 : i32
    %c0_i32_1 = arith.constant 0 : i32
    return %c0_i32, %c0_i32_0 : i32, i32
  }
  func.func @transform_4(%arg0: i32) -> (i32, i32) {
    %c0_i32 = arith.constant 0 : i32
    %c0_i32_0 = arith.constant 0 : i32
    %c0_i32_1 = arith.constant 0 : i32
    return %c0_i32, %c0_i32_0 : i32, i32
  }
  func.func @transform_5(%arg0: i32) -> (i32, i32) {
    %c0_i32 = arith.constant 0 : i32
    %c0_i32_0 = arith.constant 0 : i32
    %c0_i32_1 = arith.constant 0 : i32
    return %c0_i32, %c0_i32_0 : i32, i32
  }
  func.func @transform_6(%arg0: i32) -> (i32, i32) {
    %c0_i32 = arith.constant 0 : i32
    %c0_i32_0 = arith.constant 0 : i32
    %c0_i32_1 = arith.constant 0 : i32
    return %c0_i32, %c0_i32_0 : i32, i32
  }
  func.func @transform_7(%arg0: i32) -> (i32, i32, i32) {
    %c0_i32 = arith.constant 0 : i32
    %c0_i32_0 = arith.constant 0 : i32
    %c0_i32_1 = arith.constant 0 : i32
    return %arg0, %c0_i32, %c0_i32_0 : i32, i32, i32
  }
}

</mosaic_0001>

<llo_original>
// kernel: tpu_custom_call.1
$region0: #{tpu_custom_call.1}
  #allocation0 [shape = 'u32[]', space=smem, size = 0x4, offset = 0x4, fixed_abs, tag = 'smem constant byte address 0x4 - core index']
  #allocation1 [shape = 'u32[72,128]{1,0:T(1,128)}', space=vmem, size = 0x9000, scoped, tag = 'internal scratch']
  %s0 = inlined_call_operand.hbm [shape: f32[2,8,32], index: 0, kind: input, shape index: {}]
  %s1 = inlined_call_operand.hbm [shape: f32[8,32], index: 1, kind: input, shape index: {}]
  %s2 = inlined_call_operand.hbm [shape: f32[2,16,32], index: 2, kind: input, shape index: {}]
  %s3 = inlined_call_operand.hbm [shape: f32[6,32], index: 3, kind: input, shape index: {}]
  %s4 = inlined_call_operand.hbm [shape: f32[32,96], index: 4, kind: input, shape index: {}]
  %s5 = inlined_call_operand.hbm [shape: f32[32,32], index: 5, kind: input, shape index: {}]
  %s6 = inlined_call_operand.vmem [shape: f32[1,32], index: 6, kind: input, shape index: {}]
  %s7 = inlined_call_operand.hbm [shape: f32[2,8,32], index: 7, kind: output, shape index: {}]
  %s8 = sld [smem:[#allocation0]]
  $region85: #{tpu_custom_call.1} parent=0
    _
  %s10 = ssub.s32 1, %s8
  %s11 = scalar_select 0, %s10, %s8
  $region1: #{tpu_custom_call.1} parent=0
    #allocation2 [shape = 'u8[8192]{0}', space=vmem, size = 0x2000, scoped, tag = 'input window, operand 0']
    #allocation3 [shape = 's32[2]{0}', space=sflag, size = 0x8, scoped, tag = 'scoped memory for tpu_custom_call.1']
    #allocation4 [shape = 's32[2]{0}', space=sflag, size = 0x8, scoped, tag = 'scoped memory for tpu_custom_call.1']
    #allocation5 [shape = 'u8[4096]{0}', space=vmem, size = 0x1000, scoped, tag = 'input window, operand 1, single buffered']
    #allocation6 [shape = 's32[1]{0}', space=sflag, size = 0x4, scoped, tag = 'scoped memory for tpu_custom_call.1']
    #allocation7 [shape = 'u8[16384]{0}', space=vmem, size = 0x4000, scoped, tag = 'input window, operand 2']
    #allocation8 [shape = 'u8[4096]{0}', space=vmem, size = 0x1000, scoped, tag = 'input window, operand 3, single buffered']
    #allocation9 [shape = 'u8[16384]{0}', space=vmem, size = 0x4000, scoped, tag = 'input window, operand 4, single buffered']
    #allocation10 [shape = 's32[1]{0}', space=sflag, size = 0x4, scoped, tag = 'scoped memory for tpu_custom_call.1']
    #allocation11 [shape = 'u8[16384]{0}', space=vmem, size = 0x4000, scoped, tag = 'input window, operand 5, single buffered']
    #allocation12 [shape = 'u8[8192]{0}', space=vmem, size = 0x2000, scoped, tag = 'output window, operand 0']
    %12 = vsyncpa [#allocation3], 0
    %s13 = scalar_lea.sflag [#allocation3], 1
    %14 = vsyncpa %s13, 0
    %15 = vsyncpa [#allocation6], 0
    %16 = vsyncpa [#allocation10], 0
    %17 = vsyncpa [#allocation4], 0
    %s18 = scalar_lea.sflag [#allocation4], 1
    %19 = vsyncpa %s18, 0
    loop: start=0, step=1, limit=4
    $region2: #{tpu_custom_call.1} parent=1 // loop_pre_header
      _
    $region3: #{tpu_custom_call.1} parent=1 // loop_header
      %s21 = sphi 0, %s25
      %p22 = scmp.ge.s32.totalorder %s21, 4
      %s31 = sphi 0, %s33
      %s34 = sphi 0, %s31
      %s35 = sphi 0, %s34
      %s51 = sphi 0, %s35
      %s55 = sphi 0, %s55
      %s57 = sphi 0, %s55
      %s58 = sphi 0, %s57
      %s72 = sphi 0, %s58
      %s78 = sphi 0, %s80
      %s81 = sphi 0, %s78
      %s82 = sphi 0, %s81
      %s98 = sphi 0, %s82
      %s102 = sphi 0, %s102
      %s104 = sphi 0, %s102
      %s105 = sphi 0, %s104
      %s119 = sphi 0, %s105
      %s123 = sphi 0, %s123
      %s125 = sphi 0, %s123
      %s126 = sphi 0, %s125
      %s140 = sphi 0, %s126
      %s144 = sphi 0, %s144
      %s146 = sphi 0, %s144
      %s147 = sphi 0, %s146
      %s161 = sphi 0, %s147
      %s165 = sphi 0, %s165
      %s167 = sphi 0, %s165
      %s168 = sphi 0, %s167
      %s182 = sphi 0, %s168
      %s188 = sphi 0, %s190
      %s191 = sphi 0, %s188
      %s192 = sphi 0, %s191
      %s208 = sphi 0, %s192
    $region4: #{tpu_custom_call.1} parent=1 // loop_header_branch
      %24 = sbr.rel (%p22) target = $region8
    $region5: #{tpu_custom_call.1} parent=1 // loop_body
      %s26 = ssub.s32 %s21, 1
      %s27 = ssub.s32 %s21, 2
      %s28 = sadd.s32 %s21, 1
      %s29 = ssub.s32 %s21, %s28
      %p30 = scmp.eq.s32.totalorder %s29, 0
      %s32 = sadd.s32 %s31, 1
      %s33 = scalar_select %p30, %s31, %s32
      %p36 = pneg %p30
      %p37 = scmp.eq.s32.totalorder %s21, 1
      %p38 = por %p36, %p37
      %p39 = scmp.ne.s32.totalorder %s31, %s34
      %p40 = scmp.eq.s32.totalorder %s21, 0
      %p41 = por %p39, %p40
      %p42 = scmp.ne.s32.totalorder %s31, %s34
      %p43 = scmp.eq.s32.totalorder %s26, 1
      %p44 = por %p42, %p43
      %p45 = scmp.ne.s32.totalorder %s34, %s35
      %p46 = scmp.eq.s32.totalorder %s26, 0
      %p47 = por %p45, %p46
      %p48 = scmp.ne.s32.totalorder %s34, %s35
      %p49 = scmp.eq.s32.totalorder %s27, 1
      %p50 = por %p48, %p49
      %p52 = scmp.ne.s32.totalorder %s35, %s51
      %p53 = scmp.eq.s32.totalorder %s27, 0
      %p54 = por %p52, %p53
      %s56 = sadd.s32 %s55, 1
      %p59 = scmp.eq.s32.totalorder %s21, 1
      %p60 = scmp.ne.s32.totalorder %s55, %s57
      %p61 = scmp.eq.s32.totalorder %s21, 0
      %p62 = por %p60, %p61
      %p63 = scmp.ne.s32.totalorder %s55, %s57
      %p64 = scmp.eq.s32.totalorder %s26, 1
      %p65 = por %p63, %p64
      %p66 = scmp.ne.s32.totalorder %s57, %s58
      %p67 = scmp.eq.s32.totalorder %s26, 0
      %p68 = por %p66, %p67
      %p69 = scmp.ne.s32.totalorder %s57, %s58
      %p70 = scmp.eq.s32.totalorder %s27, 1
      %p71 = por %p69, %p70
      %p73 = scmp.ne.s32.totalorder %s58, %s72
      %p74 = scmp.eq.s32.totalorder %s27, 0
      %p75 = por %p73, %p74
      %s76 = ssub.s32 %s21, %s28
      %p77 = scmp.eq.s32.totalorder %s76, 0
      %s79 = sadd.s32 %s78, 1
      %s80 = scalar_select %p77, %s78, %s79
      %p83 = pneg %p77
      %p84 = scmp.eq.s32.totalorder %s21, 1
      %p85 = por %p83, %p84
      %p86 = scmp.ne.s32.totalorder %s78, %s81
      %p87 = scmp.eq.s32.totalorder %s21, 0
      %p88 = por %p86, %p87
      %p89 = scmp.ne.s32.totalorder %s78, %s81
      %p90 = scmp.eq.s32.totalorder %s26, 1
      %p91 = por %p89, %p90
      %p92 = scmp.ne.s32.totalorder %s81, %s82
      %p93 = scmp.eq.s32.totalorder %s26, 0
      %p94 = por %p92, %p93
      %p95 = scmp.ne.s32.totalorder %s81, %s82
      %p96 = scmp.eq.s32.totalorder %s27, 1
      %p97 = por %p95, %p96
      %p99 = scmp.ne.s32.totalorder %s82, %s98
      %p100 = scmp.eq.s32.totalorder %s27, 0
      %p101 = por %p99, %p100
      %s103 = sadd.s32 %s102, 1
      %p106 = scmp.eq.s32.totalorder %s21, 1
      %p107 = scmp.ne.s32.totalorder %s102, %s104
      %p108 = scmp.eq.s32.totalorder %s21, 0
      %p109 = por %p107, %p108
      %p110 = scmp.ne.s32.totalorder %s102, %s104
      %p111 = scmp.eq.s32.totalorder %s26, 1
      %p112 = por %p110, %p111
      %p113 = scmp.ne.s32.totalorder %s104, %s105
      %p114 = scmp.eq.s32.totalorder %s26, 0
      %p115 = por %p113, %p114
      %p116 = scmp.ne.s32.totalorder %s104, %s105
      %p117 = scmp.eq.s32.totalorder %s27, 1
      %p118 = por %p116, %p117
      %p120 = scmp.ne.s32.totalorder %s105, %s119
      %p121 = scmp.eq.s32.totalorder %s27, 0
      %p122 = por %p120, %p121
      %s124 = sadd.s32 %s123, 1
      %p127 = scmp.eq.s32.totalorder %s21, 1
      %p128 = scmp.ne.s32.totalorder %s123, %s125
      %p129 = scmp.eq.s32.totalorder %s21, 0
      %p130 = por %p128, %p129
      %p131 = scmp.ne.s32.totalorder %s123, %s125
      %p132 = scmp.eq.s32.totalorder %s26, 1
      %p133 = por %p131, %p132
      %p134 = scmp.ne.s32.totalorder %s125, %s126
      %p135 = scmp.eq.s32.totalorder %s26, 0
      %p136 = por %p134, %p135
      %p137 = scmp.ne.s32.totalorder %s125, %s126
      %p138 = scmp.eq.s32.totalorder %s27, 1
      %p139 = por %p137, %p138
      %p141 = scmp.ne.s32.totalorder %s126, %s140
      %p142 = scmp.eq.s32.totalorder %s27, 0
      %p143 = por %p141, %p142
      %s145 = sadd.s32 %s144, 1
      %p148 = scmp.eq.s32.totalorder %s21, 1
      %p149 = scmp.ne.s32.totalorder %s144, %s146
      %p150 = scmp.eq.s32.totalorder %s21, 0
      %p151 = por %p149, %p150
      %p152 = scmp.ne.s32.totalorder %s144, %s146
      %p153 = scmp.eq.s32.totalorder %s26, 1
      %p154 = por %p152, %p153
      %p155 = scmp.ne.s32.totalorder %s146, %s147
      %p156 = scmp.eq.s32.totalorder %s26, 0
      %p157 = por %p155, %p156
      %p158 = scmp.ne.s32.totalorder %s146, %s147
      %p159 = scmp.eq.s32.totalorder %s27, 1
      %p160 = por %p158, %p159
      %p162 = scmp.ne.s32.totalorder %s147, %s161
      %p163 = scmp.eq.s32.totalorder %s27, 0
      %p164 = por %p162, %p163
      %s166 = sadd.s32 %s165, 1
      %p169 = scmp.eq.s32.totalorder %s21, 1
      %p170 = scmp.ne.s32.totalorder %s165, %s167
      %p171 = scmp.eq.s32.totalorder %s21, 0
      %p172 = por %p170, %p171
      %p173 = scmp.ne.s32.totalorder %s165, %s167
      %p174 = scmp.eq.s32.totalorder %s26, 1
      %p175 = por %p173, %p174
      %p176 = scmp.ne.s32.totalorder %s167, %s168
      %p177 = scmp.eq.s32.totalorder %s26, 0
      %p178 = por %p176, %p177
      %p179 = scmp.ne.s32.totalorder %s167, %s168
      %p180 = scmp.eq.s32.totalorder %s27, 1
      %p181 = por %p179, %p180
      %p183 = scmp.ne.s32.totalorder %s168, %s182
      %p184 = scmp.eq.s32.totalorder %s27, 0
      %p185 = por %p183, %p184
      %s186 = ssub.s32 %s21, %s28
      %p187 = scmp.eq.s32.totalorder %s186, 0
      %s189 = sadd.s32 %s188, 1
      %s190 = scalar_select %p187, %s188, %s189
      %p193 = pneg %p187
      %p194 = scmp.eq.s32.totalorder %s21, 1
      %p195 = por %p193, %p194
      %p196 = scmp.ne.s32.totalorder %s188, %s191
      %p197 = scmp.eq.s32.totalorder %s21, 0
      %p198 = por %p196, %p197
      %p199 = scmp.ne.s32.totalorder %s188, %s191
      %p200 = scmp.eq.s32.totalorder %s26, 1
      %p201 = por %p199, %p200
      %p202 = scmp.ne.s32.totalorder %s191, %s192
      %p203 = scmp.eq.s32.totalorder %s26, 0
      %p204 = por %p202, %p203
      %p205 = scmp.ne.s32.totalorder %s191, %s192
      %p206 = scmp.eq.s32.totalorder %s27, 1
      %p207 = por %p205, %p206
      %p209 = scmp.ne.s32.totalorder %s192, %s208
      %p210 = scmp.eq.s32.totalorder %s27, 0
      %p211 = por %p209, %p210
      %p212 = scmp.le.s32.totalorder 1, %s21
      %p213 = scmp.lt.s32.totalorder %s21, 3
      %p214 = pnand %p212, %p213
      %p215 = pneg %p214
      // Predicated region
      $region9: #{tpu_custom_call.1} parent=5 // pred_check
        _
      $region10: #{tpu_custom_call.1} parent=5 // pred_check_branch
        %217 = sbr.rel (%p214) target = $region12
      $region11: #{tpu_custom_call.1} parent=5 // pred_region
        %s218 = ssub.s32 %s21, 1
        // Predicated region
        $region13: #{tpu_custom_call.1} parent=11 // pred_check
          %p219 = pneg %p68
        $region14: #{tpu_custom_call.1} parent=11 // pred_check_branch
          %221 = sbr.rel (%p219) target = $region16
        $region15: #{tpu_custom_call.1} parent=11 // pred_region
          %223 = vsyncadd [#allocation6], 0
          %s225 = sshll.u32 %s1, 4
          %s226 = int_to_ptr.hbm [resolvable:$true] %s225
          %s227 = sshll.u32 [#allocation5], 4
          %s228 = int_to_ptr.vmem [resolvable:$true] %s227
          %230 = dma.hbm_to_vmem [thread:$0]  %s226, 128, %s228, [#allocation6]
        $region16: #{tpu_custom_call.1} parent=11 // pred_fallthru
          _
        // Predicated region
        $region17: #{tpu_custom_call.1} parent=11 // pred_check
          %p231 = pneg %p115
        $region18: #{tpu_custom_call.1} parent=11 // pred_check_branch
          %233 = sbr.rel (%p231) target = $region20
        $region19: #{tpu_custom_call.1} parent=11 // pred_region
          %235 = vsyncadd [#allocation6], 0
          %s237 = sshll.u32 %s3, 4
          %s238 = int_to_ptr.hbm [resolvable:$true] %s237
          %s239 = sshll.u32 [#allocation8], 4
          %s240 = int_to_ptr.vmem [resolvable:$true] %s239
          %242 = dma.hbm_to_vmem [thread:$0]  %s238, 128, %s240, [#allocation6]
        $region20: #{tpu_custom_call.1} parent=11 // pred_fallthru
          _
        // Predicated region
        $region21: #{tpu_custom_call.1} parent=11 // pred_check
          %p243 = pneg %p136
        $region22: #{tpu_custom_call.1} parent=11 // pred_check_branch
          %245 = sbr.rel (%p243) target = $region24
        $region23: #{tpu_custom_call.1} parent=11 // pred_region
          %247 = vsyncadd [#allocation10], 0
          %s248 = sshll.u32 %s4, 4
          %s249 = int_to_ptr.hbm [resolvable:$true] %s248
          %s250 = sshll.u32 [#allocation9], 4
          %s251 = int_to_ptr.vmem [resolvable:$true] %s250
          %256 = dma.hbm_to_vmem [thread:$0]  %s249, 512, %s251, [#allocation10], 128, 128, 8
        $region24: #{tpu_custom_call.1} parent=11 // pred_fallthru
          _
        // Predicated region
        $region25: #{tpu_custom_call.1} parent=11 // pred_check
          %p257 = pneg %p157
        $region26: #{tpu_custom_call.1} parent=11 // pred_check_branch
          %259 = sbr.rel (%p257) target = $region28
        $region27: #{tpu_custom_call.1} parent=11 // pred_region
          %261 = vsyncadd [#allocation10], 0
          %s262 = sshll.u32 %s5, 4
          %s263 = int_to_ptr.hbm [resolvable:$true] %s262
          %s264 = sshll.u32 [#allocation11], 4
          %s265 = int_to_ptr.vmem [resolvable:$true] %s264
          %270 = dma.hbm_to_vmem [thread:$0]  %s263, 512, %s265, [#allocation10], 128, 128, 8
        $region28: #{tpu_custom_call.1} parent=11 // pred_fallthru
          _
        // Predicated region
        $region29: #{tpu_custom_call.1} parent=11 // pred_check
          %p271 = pneg %p178
        $region30: #{tpu_custom_call.1} parent=11 // pred_check_branch
          %273 = sbr.rel (%p271) target = $region32
        $region31: #{tpu_custom_call.1} parent=11 // pred_region
          _
        $region32: #{tpu_custom_call.1} parent=11 // pred_fallthru
          _
      $region12: #{tpu_custom_call.1} parent=5 // pred_fallthru
        _
      %p274 = scmp.lt.s32.totalorder %s21, 2
      // Predicated region
      $region33: #{tpu_custom_call.1} parent=5 // pred_check
        %p275 = pneg %p274
      $region34: #{tpu_custom_call.1} parent=5 // pred_check_branch
        %277 = sbr.rel (%p275) target = $region36
      $region35: #{tpu_custom_call.1} parent=5 // pred_region
        // Predicated region
        $region37: #{tpu_custom_call.1} parent=35 // pred_check
          %p278 = pneg %p41
        $region38: #{tpu_custom_call.1} parent=35 // pred_check_branch
          %280 = sbr.rel (%p278) target = $region40
        $region39: #{tpu_custom_call.1} parent=35 // pred_region
          %s281 = sand.u32 %s21, 1
          %s282 = scalar_lea.sflag [#allocation3], %s281
          %s283 = sand.u32 %s31, 1
          %s284 = smul.addr %s283, 8
          %s285 = scalar_lea.vmem [#allocation2], %s284
          %287 = vsyncadd %s282, 0
          %s288 = smul.addr %s21, 8
          %s289 = scalar_lea.hbm %s0, %s288
          %s291 = sshll.u32 %s289, 4
          %s292 = int_to_ptr.hbm [resolvable:$true] %s291
          %s293 = sshll.u32 %s285, 4
          %s294 = int_to_ptr.vmem [resolvable:$true] %s293
          %296 = dma.hbm_to_vmem [thread:$0]  %s292, 128, %s294, %s282
        $region40: #{tpu_custom_call.1} parent=35 // pred_fallthru
          _
        // Predicated region
        $region41: #{tpu_custom_call.1} parent=35 // pred_check
          %p297 = pneg %p88
        $region42: #{tpu_custom_call.1} parent=35 // pred_check_branch
          %299 = sbr.rel (%p297) target = $region44
        $region43: #{tpu_custom_call.1} parent=35 // pred_region
          %s300 = sand.u32 %s21, 1
          %s301 = scalar_lea.sflag [#allocation3], %s300
          %s302 = sand.u32 %s78, 1
          %s303 = smul.addr %s302, 16
          %s304 = scalar_lea.vmem [#allocation7], %s303
          %306 = vsyncadd %s301, 0
          %s307 = smul.addr %s21, 2
          %s308 = smul.addr %s307, 8
          %s309 = scalar_lea.hbm %s2, %s308
          %s310 = sshll.u32 %s309, 4
          %s311 = int_to_ptr.hbm [resolvable:$true] %s310
          %s312 = sshll.u32 %s304, 4
          %s313 = int_to_ptr.vmem [resolvable:$true] %s312
          %318 = dma.hbm_to_vmem [thread:$0]  %s311, 256, %s313, %s301, 128, 128, 8
        $region44: #{tpu_custom_call.1} parent=35 // pred_fallthru
          _
      $region36: #{tpu_custom_call.1} parent=5 // pred_fallthru
        _
      %p319 = scmp.le.s32.totalorder 1, %s21
      %p320 = scmp.lt.s32.totalorder %s21, 3
      %p321 = pnand %p319, %p320
      %p322 = pneg %p321
      // Predicated region
      $region45: #{tpu_custom_call.1} parent=5 // pred_check
        _
      $region46: #{tpu_custom_call.1} parent=5 // pred_check_branch
        %324 = sbr.rel (%p321) target = $region48
      $region47: #{tpu_custom_call.1} parent=5 // pred_region
        %s325 = ssub.s32 %s21, 1
        %s326 = sand.u32 %s26, 1
        %s327 = scalar_lea.sflag [#allocation3], %s326
        %s328 = sand.u32 %s34, 1
        %s329 = smul.addr %s328, 8
        %s330 = scalar_lea.vmem [#allocation2], %s329
        // Predicated region
        $region49: #{tpu_custom_call.1} parent=47 // pred_check
          %p331 = pneg %p47
        $region50: #{tpu_custom_call.1} parent=47 // pred_check_branch
          %333 = sbr.rel (%p331) target = $region52
        $region51: #{tpu_custom_call.1} parent=47 // pred_region
          %335 = dma.done %s327, 128
        $region52: #{tpu_custom_call.1} parent=47 // pred_fallthru
          _
        // Predicated region
        $region53: #{tpu_custom_call.1} parent=47 // pred_check
          %p336 = pneg %p68
        $region54: #{tpu_custom_call.1} parent=47 // pred_check_branch
          %338 = sbr.rel (%p336) target = $region56
        $region55: #{tpu_custom_call.1} parent=47 // pred_region
          %340 = dma.done [#allocation6], 128
        $region56: #{tpu_custom_call.1} parent=47 // pred_fallthru
          _
        %s341 = sand.u32 %s26, 1
        %s342 = scalar_lea.sflag [#allocation3], %s341
        %s343 = sand.u32 %s81, 1
        %s344 = smul.addr %s343, 16
        %s345 = scalar_lea.vmem [#allocation7], %s344
        // Predicated region
        $region57: #{tpu_custom_call.1} parent=47 // pred_check
          %p346 = pneg %p94
        $region58: #{tpu_custom_call.1} parent=47 // pred_check_branch
          %348 = sbr.rel (%p346) target = $region60
        $region59: #{tpu_custom_call.1} parent=47 // pred_region
          %350 = dma.done %s342, 256
        $region60: #{tpu_custom_call.1} parent=47 // pred_fallthru
          _
        // Predicated region
        $region61: #{tpu_custom_call.1} parent=47 // pred_check
          %p351 = pneg %p115
        $region62: #{tpu_custom_call.1} parent=47 // pred_check_branch
          %353 = sbr.rel (%p351) target = $region64
        $region63: #{tpu_custom_call.1} parent=47 // pred_region
          %355 = dma.done [#allocation6], 128
        $region64: #{tpu_custom_call.1} parent=47 // pred_fallthru
          _
        // Predicated region
        $region65: #{tpu_custom_call.1} parent=47 // pred_check
          %p356 = pneg %p136
        $region66: #{tpu_custom_call.1} parent=47 // pred_check_branch
          %358 = sbr.rel (%p356) target = $region68
        $region67: #{tpu_custom_call.1} parent=47 // pred_region
          %360 = dma.done [#allocation10], 512
        $region68: #{tpu_custom_call.1} parent=47 // pred_fallthru
          _
        // Predicated region
        $region69: #{tpu_custom_call.1} parent=47 // pred_check
          %p361 = pneg %p157
        $region70: #{tpu_custom_call.1} parent=47 // pred_check_branch
          %363 = sbr.rel (%p361) target = $region72
        $region71: #{tpu_custom_call.1} parent=47 // pred_region
          %365 = dma.done [#allocation10], 512
        $region72: #{tpu_custom_call.1} parent=47 // pred_fallthru
          _
        %s366 = sand.u32 %s26, 1
        %s367 = scalar_lea.sflag [#allocation3], %s366
        %s368 = sand.u32 %s34, 1
        %s369 = smul.addr %s368, 8
        %s370 = scalar_lea.vmem [#allocation2], %s369
        %p371 = pneg %p47
        %p372 = pneg %p44
        %p373 = pneg %p68
        %p374 = pneg %p65
        %s375 = sand.u32 %s26, 1
        %s376 = scalar_lea.sflag [#allocation3], %s375
        %s377 = sand.u32 %s81, 1
        %s378 = smul.addr %s377, 16
        %s379 = scalar_lea.vmem [#allocation7], %s378
        %p380 = pneg %p94
        %p381 = pneg %p91
        %p382 = pneg %p115
        %p383 = pneg %p112
        %p384 = pneg %p136
        %p385 = pneg %p133
        %p386 = pneg %p157
        %p387 = pneg %p154
        %p388 = pneg %p178
        %p389 = pneg %p175
        %p390 = pneg %p204
        %p391 = pneg %p201
        %s392 = sand.u32 %s191, 1
        %s393 = scalar_lea.sflag [#allocation4], %s392
        %s394 = sand.u32 %s191, 1
        %s395 = smul.addr %s394, 8
        %s396 = scalar_lea.vmem [#allocation12], %s395
        %v397 = vld [vmem:[%s330] sm:$0xff]
        %v398 = vld [vmem:[%s345] sm:$0xff]
        %v399 = vld [vmem:[%s345 + $0x8] sm:$0xff]
        %v400 = vld [vmem:[#allocation5] sm:$0xff]
        %v401 = vadd.f32 %v397, %v400
        %v402 = vld [vmem:[#allocation8] sm:$0x3f]
        %vm403 = vcmask 261120
        %v404 = vsel %vm403, %v401, 0.0
        %405 = vadd.xlane.f32.xlu0 %v404
        %v406 = vpop.xlane.xlu0 %405
        %v407 = vrcp.pop 32.0
        %v408 = vmul.f32 32.0, %v407
        %v409 = vsub.f32 1.0, %v408
        %v410 = vmul.f32 %v407, %v409
        %v411 = vadd.f32 %v407, %v410
        %vm412 = vweird.f32 %v407
        %v413 = vsel %vm412, %v407, %v411
        %v414 = vmul.f32 %v406, %v413
        %v415 = vsub.f32 %v401, %v414
        %v416 = vmul.f32 %v415, %v415
        %v417 = vsel %vm403, %v416, 0.0
        %418 = vadd.xlane.f32.xlu0 %v417
        %v419 = vpop.xlane.xlu0 %418
        %v420 = vmul.f32 %v419, %v413
        %v421 = vadd.f32 %v420, 1e-05
        %v422 = vrsqrt.pop %v421
        %v423 = vmul.f32 %v422, %v421
        %v424 = vmul.f32 %v423, %v422
        %v425 = vmul.f32 0.5, %v424
        %v426 = vsub.f32 1.5, %v425
        %v427 = vmul.f32 %v422, %v426
        %vm428 = vweird.f32 %v421
        %vm429 = vweird.f32 %v422
        %vm430 = vmor %vm428, %vm429
        %v431 = vsel %vm430, %v422, %v427
        %v432 = vmul.f32 %v415, %v431
        %v433 = vperm.slane %v402, 0
        %v434 = vmul.f32 %v432, %v433
        %v435 = vperm.slane %v402, 1
        %v436 = vadd.f32 %v434, %v435
        %v437 = vsel %vm403, %v398, 0.0
        %438 = vadd.xlane.f32.xlu0 %v437
        %v439 = vpop.xlane.xlu0 %438
        %v440 = vsel %vm403, %v399, 0.0
        %441 = vadd.xlane.f32.xlu0 %v440
        %v442 = vpop.xlane.xlu0 %441
        %v443 = vmul.f32 %v439, %v413
        %v444 = vmul.f32 %v442, %v413
        %v445 = vsub.f32 %v398, %v443
        %v446 = vsub.f32 %v399, %v444
        %v447 = vmul.f32 %v445, %v445
        %v448 = vmul.f32 %v446, %v446
        %v449 = vsel %vm403, %v447, 0.0
        %450 = vadd.xlane.f32.xlu0 %v449
        %v451 = vpop.xlane.xlu0 %450
        %v452 = vsel %vm403, %v448, 0.0
        %453 = vadd.xlane.f32.xlu0 %v452
        %v454 = vpop.xlane.xlu0 %453
        %v455 = vmul.f32 %v451, %v413
        %v456 = vmul.f32 %v454, %v413
        %v457 = vadd.f32 %v455, 1e-05
        %v458 = vadd.f32 %v456, 1e-05
        %v459 = vrsqrt.pop %v457
        %v460 = vmul.f32 %v459, %v457
        %v461 = vmul.f32 %v460, %v459
        %v462 = vmul.f32 0.5, %v461
        %v463 = vsub.f32 1.5, %v462
        %v464 = vmul.f32 %v459, %v463
        %vm465 = vweird.f32 %v457
        %vm466 = vweird.f32 %v459
        %vm467 = vmor %vm465, %vm466
        %v468 = vsel %vm467, %v459, %v464
        %v469 = vrsqrt.pop %v458
        %v470 = vmul.f32 %v469, %v458
        %v471 = vmul.f32 %v470, %v469
        %v472 = vmul.f32 0.5, %v471
        %v473 = vsub.f32 1.5, %v472
        %v474 = vmul.f32 %v469, %v473
        %vm475 = vweird.f32 %v458
        %vm476 = vweird.f32 %v469
        %vm477 = vmor %vm475, %vm476
        %v478 = vsel %vm477, %v469, %v474
        %v479 = vmul.f32 %v445, %v468
        %v480 = vmul.f32 %v446, %v478
        %v481 = vperm.slane %v402, 2
        %v482 = vmul.f32 %v479, %v481
        %v483 = vmul.f32 %v480, %v481
        %v484 = vperm.slane %v402, 3
        %v485 = vadd.f32 %v482, %v484
        %v486 = vadd.f32 %v483, %v484
        %v487 = vperm.slane %v402, 4
        %v488 = vmul.f32 %v479, %v487
        %v489 = vmul.f32 %v480, %v487
        %v490 = vperm.slane %v402, 5
        %v491 = vadd.f32 %v488, %v490
        %v492 = vadd.f32 %v489, %v490
        %v493 = vld [vmem:[#allocation9] sm:$0xff]
        %v494 = vld [vmem:[#allocation9 + $0x8] sm:$0xff]
        %v495 = vld [vmem:[#allocation9 + $0x10] sm:$0xff]
        %v496 = vld [vmem:[#allocation9 + $0x18] sm:$0xff]
        %v498 = vsel %vm403, %v436, 0
        %500 = vmatpush.msra.mxu0 0.0
        %501 = vmatpush.msra.mxu0 0.0
        %502 = vmatpush.msra.mxu0 0.0
        %503 = vmatpush.msra.mxu0 0.0
        %504 = vmatpush.msra.mxu0 0.0
        %505 = vmatpush.msra.mxu0 0.0
        %506 = vmatpush.msra.mxu0 0.0
        %507 = vmatpush.msra.mxu0 0.0
        %508 = vmatpush.msra.mxu0 0.0
        %509 = vmatpush.msra.mxu0 0.0
        %510 = vmatpush.msra.mxu0 0.0
        %511 = vmatpush.msra.mxu0 0.0
        %512 = vmatpush.msra.mxu0 %v496
        %513 = vmatpush.msra.mxu0 %v495
        %514 = vmatpush.msra.mxu0 %v494
        %515 = vmatpush.msra.mxu0 %v493
        %516 = vmatmul.f32.gmra.mxu0 %v498
        %v517 = vpop.f32.mrf.mxu0
        %v518 = vadd.f32 0.0, %v517
        %519 = vdwg.mxu0
        %524 = vrot.lane.b32.xlu0 %v493, 96
        %v525 = vpop.permute.xlu0 %524
        %526 = vrot.lane.b32.xlu0 %v494, 96
        %v527 = vpop.permute.xlu0 %526
        %528 = vrot.lane.b32.xlu0 %v495, 96
        %v529 = vpop.permute.xlu0 %528
        %530 = vrot.lane.b32.xlu0 %v496, 96
        %v531 = vpop.permute.xlu0 %530
        %v537 = vsel %vm403, %v485, 0
        %v540 = vsel %vm403, %v486, 0
        %542 = vmatpush.msra.mxu0 0.0
        %543 = vmatpush.msra.mxu0 0.0
        %544 = vmatpush.msra.mxu0 0.0
        %545 = vmatpush.msra.mxu0 0.0
        %546 = vmatpush.msra.mxu0 0.0
        %547 = vmatpush.msra.mxu0 0.0
        %548 = vmatpush.msra.mxu0 0.0
        %549 = vmatpush.msra.mxu0 0.0
        %550 = vmatpush.msra.mxu0 0.0
        %551 = vmatpush.msra.mxu0 0.0
        %552 = vmatpush.msra.mxu0 0.0
        %553 = vmatpush.msra.mxu0 0.0
        %554 = vmatpush.msra.mxu0 %v531
        %555 = vmatpush.msra.mxu0 %v529
        %556 = vmatpush.msra.mxu0 %v527
        %557 = vmatpush.msra.mxu0 %v525
        %558 = vmatmul.f32.gmra.mxu0 %v537
        %v559 = vpop.f32.mrf.mxu0
        %v560 = vadd.f32 0.0, %v559
        %561 = vmatmul.f32.gmra.mxu0 %v540
        %v562 = vpop.f32.mrf.mxu0
        %v563 = vadd.f32 0.0, %v562
        %564 = vdwg.mxu0
        %565 = vrot.lane.b32.xlu0 %v493, 64
        %v566 = vpop.permute.xlu0 %565
        %567 = vrot.lane.b32.xlu0 %v494, 64
        %v568 = vpop.permute.xlu0 %567
        %569 = vrot.lane.b32.xlu0 %v495, 64
        %v570 = vpop.permute.xlu0 %569
        %571 = vrot.lane.b32.xlu0 %v496, 64
        %v572 = vpop.permute.xlu0 %571
        %v578 = vsel %vm403, %v491, 0
        %v581 = vsel %vm403, %v492, 0
        %583 = vmatpush.msra.mxu0 0.0
        %584 = vmatpush.msra.mxu0 0.0
        %585 = vmatpush.msra.mxu0 0.0
        %586 = vmatpush.msra.mxu0 0.0
        %587 = vmatpush.msra.mxu0 0.0
        %588 = vmatpush.msra.mxu0 0.0
        %589 = vmatpush.msra.mxu0 0.0
        %590 = vmatpush.msra.mxu0 0.0
        %591 = vmatpush.msra.mxu0 0.0
        %592 = vmatpush.msra.mxu0 0.0
        %593 = vmatpush.msra.mxu0 0.0
        %594 = vmatpush.msra.mxu0 0.0
        %595 = vmatpush.msra.mxu0 %v572
        %596 = vmatpush.msra.mxu0 %v570
        %597 = vmatpush.msra.mxu0 %v568
        %598 = vmatpush.msra.mxu0 %v566
        %599 = vmatmul.f32.gmra.mxu0 %v578
        %v600 = vpop.f32.mrf.mxu0
        %v601 = vadd.f32 0.0, %v600
        %602 = vmatmul.f32.gmra.mxu0 %v581
        %v603 = vpop.f32.mrf.mxu0
        %v604 = vadd.f32 0.0, %v603
        %605 = vdwg.mxu0
        %v606 = vld [vmem:[#allocation11] sm:$0xff]
        %v607 = vld [vmem:[#allocation11 + $0x8] sm:$0xff]
        %v608 = vld [vmem:[#allocation11 + $0x10] sm:$0xff]
        %v609 = vld [vmem:[#allocation11 + $0x18] sm:$0xff]
        %vm610 = vcmask 64512
        %v612 = vsel %vm610, %v518, 0
        %v615 = vsel %vm610, %v560, 0
        %v618 = vsel %vm610, %v563, 0
        %620 = vmatpush.xpose.msra.mxu0 0.0
        %621 = vmatpush.xpose.msra.mxu0 0.0
        %622 = vmatpush.xpose.msra.mxu0 0.0
        %623 = vmatpush.xpose.msra.mxu0 0.0
        %624 = vmatpush.xpose.msra.mxu0 0.0
        %625 = vmatpush.xpose.msra.mxu0 0.0
        %626 = vmatpush.xpose.msra.mxu0 0.0
        %627 = vmatpush.xpose.msra.mxu0 0.0
        %628 = vmatpush.xpose.msra.mxu0 0.0
        %629 = vmatpush.xpose.msra.mxu0 0.0
        %630 = vmatpush.xpose.msra.mxu0 0.0
        %631 = vmatpush.xpose.msra.mxu0 0.0
        %632 = vmatpush.xpose.msra.mxu0 0.0
        %633 = vmatpush.xpose.msra.mxu0 0.0
        %634 = vmatpush.xpose.msra.mxu0 %v618
        %635 = vmatpush.xpose.msra.mxu0 %v615
        %636 = vmatmul.f32.gmra.mxu0 %v612
        %v637 = vpop.f32.mrf.mxu0
        %v638 = vadd.f32 0.0, %v637
        %639 = vdwg.mxu0
        %v640 = vmul.f32 %v638, 0.35355338
        %vm641 = vcmask 130048
        %v642 = vsel %vm641, %v640, -inf
        %643 = vmax.xlane.f32.xlu0 %v642
        %v644 = vpop.xlane.xlu0 %643
        %v645 = vsub.f32 %v640, %v644
        %v646 = vmul.f32 %v645, 1.442695
        %v647 = vpow.pop %v646
        %v648 = vsel %vm641, %v647, 0.0
        %649 = vadd.xlane.f32.xlu0 %v648
        %v650 = vpop.xlane.xlu0 %649
        %v651 = vrcp.pop %v650
        %v652 = vmul.f32 %v650, %v651
        %v653 = vsub.f32 1.0, %v652
        %v654 = vmul.f32 %v651, %v653
        %v655 = vadd.f32 %v651, %v654
        %vm656 = vweird.f32 %v650
        %vm657 = vweird.f32 %v651
        %vm658 = vmor %vm656, %vm657
        %v659 = vsel %vm658, %v651, %v655
        %v660 = vand.u32 2147483647, %v650
        %vm661 = vcmp.eq.f32.partialorder %v660, 8.507059e+37
        %v662 = vand.u32 %v650, 2147483648
        %v663 = vor.u32 1.1754944e-38, %v662
        %v664 = vsel %vm661, %v663, %v659
        %v665 = vmul.f32 %v647, %v664
        %v667 = vsel %vm641, %v665, 0
        %669 = vmatpush.msra.mxu0 0.0
        %670 = vmatpush.msra.mxu0 0.0
        %671 = vmatpush.msra.mxu0 0.0
        %672 = vmatpush.msra.mxu0 0.0
        %673 = vmatpush.msra.mxu0 0.0
        %674 = vmatpush.msra.mxu0 0.0
        %675 = vmatpush.msra.mxu0 0.0
        %676 = vmatpush.msra.mxu0 0.0
        %677 = vmatpush.msra.mxu0 0.0
        %678 = vmatpush.msra.mxu0 0.0
        %679 = vmatpush.msra.mxu0 0.0
        %680 = vmatpush.msra.mxu0 0.0
        %681 = vmatpush.msra.mxu0 0.0
        %682 = vmatpush.msra.mxu0 0.0
        %683 = vmatpush.msra.mxu0 %v604
        %684 = vmatpush.msra.mxu0 %v601
        %685 = vmatmul.f32.gmra.mxu0 %v667
        %v686 = vpop.f32.mrf.mxu0
        %v687 = vadd.f32 0.0, %v686
        %688 = vdwg.mxu0
        %689 = vrot.lane.b32.xlu0 %v518, 120
        %v690 = vpop.permute.xlu0 %689
        %691 = vrot.lane.b32.xlu0 %v560, 120
        %v692 = vpop.permute.xlu0 %691
        %693 = vrot.lane.b32.xlu0 %v563, 120
        %v694 = vpop.permute.xlu0 %693
        %v695 = vsel %vm610, %v690, 0
        %v697 = vsel %vm610, %v692, 0
        %v699 = vsel %vm610, %v694, 0
        %701 = vmatpush.xpose.msra.mxu0 0.0
        %702 = vmatpush.xpose.msra.mxu0 0.0
        %703 = vmatpush.xpose.msra.mxu0 0.0
        %704 = vmatpush.xpose.msra.mxu0 0.0
        %705 = vmatpush.xpose.msra.mxu0 0.0
        %706 = vmatpush.xpose.msra.mxu0 0.0
        %707 = vmatpush.xpose.msra.mxu0 0.0
        %708 = vmatpush.xpose.msra.mxu0 0.0
        %709 = vmatpush.xpose.msra.mxu0 0.0
        %710 = vmatpush.xpose.msra.mxu0 0.0
        %711 = vmatpush.xpose.msra.mxu0 0.0
        %712 = vmatpush.xpose.msra.mxu0 0.0
        %713 = vmatpush.xpose.msra.mxu0 0.0
        %714 = vmatpush.xpose.msra.mxu0 0.0
        %715 = vmatpush.xpose.msra.mxu0 %v699
        %716 = vmatpush.xpose.msra.mxu0 %v697
        %717 = vmatmul.f32.gmra.mxu0 %v695
        %v718 = vpop.f32.mrf.mxu0
        %v719 = vadd.f32 0.0, %v718
        %720 = vdwg.mxu0
        %v721 = vmul.f32 %v719, 0.35355338
        %v722 = vsel %vm641, %v721, -inf
        %723 = vmax.xlane.f32.xlu0 %v722
        %v724 = vpop.xlane.xlu0 %723
        %v725 = vsub.f32 %v721, %v724
        %v726 = vmul.f32 %v725, 1.442695
        %v727 = vpow.pop %v726
        %v728 = vsel %vm641, %v727, 0.0
        %729 = vadd.xlane.f32.xlu0 %v728
        %v730 = vpop.xlane.xlu0 %729
        %v731 = vrcp.pop %v730
        %v732 = vmul.f32 %v730, %v731
        %v733 = vsub.f32 1.0, %v732
        %v734 = vmul.f32 %v731, %v733
        %v735 = vadd.f32 %v731, %v734
        %vm736 = vweird.f32 %v730
        %vm737 = vweird.f32 %v731
        %vm738 = vmor %vm736, %vm737
        %v739 = vsel %vm738, %v731, %v735
        %v740 = vand.u32 2147483647, %v730
        %vm741 = vcmp.eq.f32.partialorder %v740, 8.507059e+37
        %v742 = vand.u32 %v730, 2147483648
        %v743 = vor.u32 1.1754944e-38, %v742
        %v744 = vsel %vm741, %v743, %v739
        %v745 = vmul.f32 %v727, %v744
        %748 = vrot.lane.b32.xlu0 %v601, 120
        %v749 = vpop.permute.xlu0 %748
        %750 = vrot.lane.b32.xlu0 %v604, 120
        %v751 = vpop.permute.xlu0 %750
        %v755 = vsel %vm641, %v745, 0
        %757 = vmatpush.msra.mxu0 0.0
        %758 = vmatpush.msra.mxu0 0.0
        %759 = vmatpush.msra.mxu0 0.0
        %760 = vmatpush.msra.mxu0 0.0
        %761 = vmatpush.msra.mxu0 0.0
        %762 = vmatpush.msra.mxu0 0.0
        %763 = vmatpush.msra.mxu0 0.0
        %764 = vmatpush.msra.mxu0 0.0
        %765 = vmatpush.msra.mxu0 0.0
        %766 = vmatpush.msra.mxu0 0.0
        %767 = vmatpush.msra.mxu0 0.0
        %768 = vmatpush.msra.mxu0 0.0
        %769 = vmatpush.msra.mxu0 0.0
        %770 = vmatpush.msra.mxu0 0.0
        %771 = vmatpush.msra.mxu0 %v751
        %772 = vmatpush.msra.mxu0 %v749
        %773 = vmatmul.f32.gmra.mxu0 %v755
        %v774 = vpop.f32.mrf.mxu0
        %v775 = vadd.f32 0.0, %v774
        %776 = vdwg.mxu0
        %v778 = vsel %vm610, %v775, 0
        %780 = vmatpush.msra.mxu0 0.0
        %781 = vmatpush.msra.mxu0 0.0
        %782 = vmatpush.msra.mxu0 0.0
        %783 = vmatpush.msra.mxu0 0.0
        %784 = vmatpush.msra.mxu0 0.0
        %785 = vmatpush.msra.mxu0 0.0
        %786 = vmatpush.msra.mxu0 0.0
        %787 = vmatpush.msra.mxu0 0.0
        %788 = vmatpush.msra.mxu0 0.0
        %789 = vmatpush.msra.mxu0 0.0
        %790 = vmatpush.msra.mxu0 0.0
        %791 = vmatpush.msra.mxu0 0.0
        %792 = vmatpush.msra.mxu0 0.0
        %793 = vmatpush.msra.mxu0 0.0
        %794 = vmatpush.msra.mxu0 0.0
        %795 = vmatpush.msra.mxu0 %v607
        %796 = vmatmul.f32.gmra.mxu0 %v778
        %v797 = vpop.f32.mrf.mxu0
        %v798 = vadd.f32 0.0, %v797
        %799 = vdwg.mxu0
        %v801 = vsel %vm610, %v687, 0
        %803 = vmatpush.msra.mxu0 0.0
        %804 = vmatpush.msra.mxu0 0.0
        %805 = vmatpush.msra.mxu0 0.0
        %806 = vmatpush.msra.mxu0 0.0
        %807 = vmatpush.msra.mxu0 0.0
        %808 = vmatpush.msra.mxu0 0.0
        %809 = vmatpush.msra.mxu0 0.0
        %810 = vmatpush.msra.mxu0 0.0
        %811 = vmatpush.msra.mxu0 0.0
        %812 = vmatpush.msra.mxu0 0.0
        %813 = vmatpush.msra.mxu0 0.0
        %814 = vmatpush.msra.mxu0 0.0
        %815 = vmatpush.msra.mxu0 0.0
        %816 = vmatpush.msra.mxu0 0.0
        %817 = vmatpush.msra.mxu0 0.0
        %818 = vmatpush.msra.mxu0 %v606
        %819 = vmatmul.f32.gmra.mxu0 %v801
        %v820 = vpop.f32.mrf.mxu0
        %v821 = vadd.f32 %v798, %v820
        %822 = vdwg.mxu0
        %823 = vrot.lane.b32.xlu0 %v518, 112
        %v824 = vpop.permute.xlu0 %823
        %825 = vrot.lane.b32.xlu0 %v560, 112
        %v826 = vpop.permute.xlu0 %825
        %827 = vrot.lane.b32.xlu0 %v563, 112
        %v828 = vpop.permute.xlu0 %827
        %v829 = vsel %vm610, %v824, 0
        %v831 = vsel %vm610, %v826, 0
        %v833 = vsel %vm610, %v828, 0
        %835 = vmatpush.xpose.msra.mxu0 0.0
        %836 = vmatpush.xpose.msra.mxu0 0.0
        %837 = vmatpush.xpose.msra.mxu0 0.0
        %838 = vmatpush.xpose.msra.mxu0 0.0
        %839 = vmatpush.xpose.msra.mxu0 0.0
        %840 = vmatpush.xpose.msra.mxu0 0.0
        %841 = vmatpush.xpose.msra.mxu0 0.0
        %842 = vmatpush.xpose.msra.mxu0 0.0
        %843 = vmatpush.xpose.msra.mxu0 0.0
        %844 = vmatpush.xpose.msra.mxu0 0.0
        %845 = vmatpush.xpose.msra.mxu0 0.0
        %846 = vmatpush.xpose.msra.mxu0 0.0
        %847 = vmatpush.xpose.msra.mxu0 0.0
        %848 = vmatpush.xpose.msra.mxu0 0.0
        %849 = vmatpush.xpose.msra.mxu0 %v833
        %850 = vmatpush.xpose.msra.mxu0 %v831
        %851 = vmatmul.f32.gmra.mxu0 %v829
        %v852 = vpop.f32.mrf.mxu0
        %v853 = vadd.f32 0.0, %v852
        %854 = vdwg.mxu0
        %v855 = vmul.f32 %v853, 0.35355338
        %v856 = vsel %vm641, %v855, -inf
        %857 = vmax.xlane.f32.xlu0 %v856
        %v858 = vpop.xlane.xlu0 %857
        %v859 = vsub.f32 %v855, %v858
        %v860 = vmul.f32 %v859, 1.442695
        %v861 = vpow.pop %v860
        %v862 = vsel %vm641, %v861, 0.0
        %863 = vadd.xlane.f32.xlu0 %v862
        %v864 = vpop.xlane.xlu0 %863
        %v865 = vrcp.pop %v864
        %v866 = vmul.f32 %v864, %v865
        %v867 = vsub.f32 1.0, %v866
        %v868 = vmul.f32 %v865, %v867
        %v869 = vadd.f32 %v865, %v868
        %vm870 = vweird.f32 %v864
        %vm871 = vweird.f32 %v865
        %vm872 = vmor %vm870, %vm871
        %v873 = vsel %vm872, %v865, %v869
        %v874 = vand.u32 2147483647, %v864
        %vm875 = vcmp.eq.f32.partialorder %v874, 8.507059e+37
        %v876 = vand.u32 %v864, 2147483648
        %v877 = vor.u32 1.1754944e-38, %v876
        %v878 = vsel %vm875, %v877, %v873
        %v879 = vmul.f32 %v861, %v878
        %880 = vrot.lane.b32.xlu0 %v601, 112
        %v881 = vpop.permute.xlu0 %880
        %882 = vrot.lane.b32.xlu0 %v604, 112
        %v883 = vpop.permute.xlu0 %882
        %v887 = vsel %vm641, %v879, 0
        %889 = vmatpush.msra.mxu0 0.0
        %890 = vmatpush.msra.mxu0 0.0
        %891 = vmatpush.msra.mxu0 0.0
        %892 = vmatpush.msra.mxu0 0.0
        %893 = vmatpush.msra.mxu0 0.0
        %894 = vmatpush.msra.mxu0 0.0
        %895 = vmatpush.msra.mxu0 0.0
        %896 = vmatpush.msra.mxu0 0.0
        %897 = vmatpush.msra.mxu0 0.0
        %898 = vmatpush.msra.mxu0 0.0
        %899 = vmatpush.msra.mxu0 0.0
        %900 = vmatpush.msra.mxu0 0.0
        %901 = vmatpush.msra.mxu0 0.0
        %902 = vmatpush.msra.mxu0 0.0
        %903 = vmatpush.msra.mxu0 %v883
        %904 = vmatpush.msra.mxu0 %v881
        %905 = vmatmul.f32.gmra.mxu0 %v887
        %v906 = vpop.f32.mrf.mxu0
        %v907 = vadd.f32 0.0, %v906
        %908 = vdwg.mxu0
        %v910 = vsel %vm610, %v907, 0
        %912 = vmatpush.msra.mxu0 0.0
        %913 = vmatpush.msra.mxu0 0.0
        %914 = vmatpush.msra.mxu0 0.0
        %915 = vmatpush.msra.mxu0 0.0
        %916 = vmatpush.msra.mxu0 0.0
        %917 = vmatpush.msra.mxu0 0.0
        %918 = vmatpush.msra.mxu0 0.0
        %919 = vmatpush.msra.mxu0 0.0
        %920 = vmatpush.msra.mxu0 0.0
        %921 = vmatpush.msra.mxu0 0.0
        %922 = vmatpush.msra.mxu0 0.0
        %923 = vmatpush.msra.mxu0 0.0
        %924 = vmatpush.msra.mxu0 0.0
        %925 = vmatpush.msra.mxu0 0.0
        %926 = vmatpush.msra.mxu0 0.0
        %927 = vmatpush.msra.mxu0 %v608
        %928 = vmatmul.f32.gmra.mxu0 %v910
        %v929 = vpop.f32.mrf.mxu0
        %v930 = vadd.f32 0.0, %v929
        %931 = vdwg.mxu0
        %v932 = vadd.f32 %v821, %v930
        %933 = vrot.lane.b32.xlu0 %v518, 104
        %v934 = vpop.permute.xlu0 %933
        %935 = vrot.lane.b32.xlu0 %v560, 104
        %v936 = vpop.permute.xlu0 %935
        %937 = vrot.lane.b32.xlu0 %v563, 104
        %v938 = vpop.permute.xlu0 %937
        %v939 = vsel %vm610, %v934, 0
        %v941 = vsel %vm610, %v936, 0
        %v943 = vsel %vm610, %v938, 0
        %945 = vmatpush.xpose.msra.mxu0 0.0
        %946 = vmatpush.xpose.msra.mxu0 0.0
        %947 = vmatpush.xpose.msra.mxu0 0.0
        %948 = vmatpush.xpose.msra.mxu0 0.0
        %949 = vmatpush.xpose.msra.mxu0 0.0
        %950 = vmatpush.xpose.msra.mxu0 0.0
        %951 = vmatpush.xpose.msra.mxu0 0.0
        %952 = vmatpush.xpose.msra.mxu0 0.0
        %953 = vmatpush.xpose.msra.mxu0 0.0
        %954 = vmatpush.xpose.msra.mxu0 0.0
        %955 = vmatpush.xpose.msra.mxu0 0.0
        %956 = vmatpush.xpose.msra.mxu0 0.0
        %957 = vmatpush.xpose.msra.mxu0 0.0
        %958 = vmatpush.xpose.msra.mxu0 0.0
        %959 = vmatpush.xpose.msra.mxu0 %v943
        %960 = vmatpush.xpose.msra.mxu0 %v941
        %961 = vmatmul.f32.gmra.mxu0 %v939
        %v962 = vpop.f32.mrf.mxu0
        %v963 = vadd.f32 0.0, %v962
        %964 = vdwg.mxu0
        %v965 = vmul.f32 %v963, 0.35355338
        %v966 = vsel %vm641, %v965, -inf
        %967 = vmax.xlane.f32.xlu0 %v966
        %v968 = vpop.xlane.xlu0 %967
        %v969 = vsub.f32 %v965, %v968
        %v970 = vmul.f32 %v969, 1.442695
        %v971 = vpow.pop %v970
        %v972 = vsel %vm641, %v971, 0.0
        %973 = vadd.xlane.f32.xlu0 %v972
        %v974 = vpop.xlane.xlu0 %973
        %v975 = vrcp.pop %v974
        %v976 = vmul.f32 %v974, %v975
        %v977 = vsub.f32 1.0, %v976
        %v978 = vmul.f32 %v975, %v977
        %v979 = vadd.f32 %v975, %v978
        %vm980 = vweird.f32 %v974
        %vm981 = vweird.f32 %v975
        %vm982 = vmor %vm980, %vm981
        %v983 = vsel %vm982, %v975, %v979
        %v984 = vand.u32 2147483647, %v974
        %vm985 = vcmp.eq.f32.partialorder %v984, 8.507059e+37
        %v986 = vand.u32 %v974, 2147483648
        %v987 = vor.u32 1.1754944e-38, %v986
        %v988 = vsel %vm985, %v987, %v983
        %v989 = vmul.f32 %v971, %v988
        %990 = vrot.lane.b32.xlu0 %v601, 104
        %v991 = vpop.permute.xlu0 %990
        %992 = vrot.lane.b32.xlu0 %v604, 104
        %v993 = vpop.permute.xlu0 %992
        %v997 = vsel %vm641, %v989, 0
        %999 = vmatpush.msra.mxu0 0.0
        %1000 = vmatpush.msra.mxu0 0.0
        %1001 = vmatpush.msra.mxu0 0.0
        %1002 = vmatpush.msra.mxu0 0.0
        %1003 = vmatpush.msra.mxu0 0.0
        %1004 = vmatpush.msra.mxu0 0.0
        %1005 = vmatpush.msra.mxu0 0.0
        %1006 = vmatpush.msra.mxu0 0.0
        %1007 = vmatpush.msra.mxu0 0.0
        %1008 = vmatpush.msra.mxu0 0.0
        %1009 = vmatpush.msra.mxu0 0.0
        %1010 = vmatpush.msra.mxu0 0.0
        %1011 = vmatpush.msra.mxu0 0.0
        %1012 = vmatpush.msra.mxu0 0.0
        %1013 = vmatpush.msra.mxu0 %v993
        %1014 = vmatpush.msra.mxu0 %v991
        %1015 = vmatmul.f32.gmra.mxu0 %v997
        %v1016 = vpop.f32.mrf.mxu0
        %v1017 = vadd.f32 0.0, %v1016
        %1018 = vdwg.mxu0
        %v1020 = vsel %vm610, %v1017, 0
        %1022 = vmatpush.msra.mxu0 0.0
        %1023 = vmatpush.msra.mxu0 0.0
        %1024 = vmatpush.msra.mxu0 0.0
        %1025 = vmatpush.msra.mxu0 0.0
        %1026 = vmatpush.msra.mxu0 0.0
        %1027 = vmatpush.msra.mxu0 0.0
        %1028 = vmatpush.msra.mxu0 0.0
        %1029 = vmatpush.msra.mxu0 0.0
        %1030 = vmatpush.msra.mxu0 0.0
        %1031 = vmatpush.msra.mxu0 0.0
        %1032 = vmatpush.msra.mxu0 0.0
        %1033 = vmatpush.msra.mxu0 0.0
        %1034 = vmatpush.msra.mxu0 0.0
        %1035 = vmatpush.msra.mxu0 0.0
        %1036 = vmatpush.msra.mxu0 0.0
        %1037 = vmatpush.msra.mxu0 %v609
        %1038 = vmatmul.f32.gmra.mxu0 %v1020
        %v1039 = vpop.f32.mrf.mxu0
        %v1040 = vadd.f32 0.0, %v1039
        %1041 = vdwg.mxu0
        %v1042 = vadd.f32 %v932, %v1040
        %v1043 = vadd.f32 %v397, %v1042
        %v1044 = vld [vmem:[%s6] sm:$0x1]
        %v1046 = vperm.slane %v1044, 0
        %v1048 = vadd.f32 %v1043, %v1046
        %1049 = vst.msk [vmem:[%s396] sm:$0xff] %vm403, %v1048
        %s1050 = sand.u32 %s191, 1
        %s1051 = scalar_lea.sflag [#allocation4], %s1050
        %s1052 = sand.u32 %s191, 1
        %s1053 = smul.addr %s1052, 8
        %s1054 = scalar_lea.vmem [#allocation12], %s1053
        // Predicated region
        $region73: #{tpu_custom_call.1} parent=47 // pred_check
          %p1055 = pneg %p201
        $region74: #{tpu_custom_call.1} parent=47 // pred_check_branch
          %1057 = sbr.rel (%p1055) target = $region76
        $region75: #{tpu_custom_call.1} parent=47 // pred_region
          %1059 = vsyncadd %s1051, 0
          %s1060 = smul.addr %s26, 8
          %s1061 = scalar_lea.hbm %s7, %s1060
          %s1063 = sshll.u32 %s1054, 4
          %s1064 = int_to_ptr.vmem [resolvable:$true] %s1063
          %s1065 = sshll.u32 %s1061, 4
          %s1066 = int_to_ptr.hbm [resolvable:$true] %s1065
          %1068 = dma.vmem_to_hbm [thread:$0]  %s1064, 128, %s1066, %s1051
        $region76: #{tpu_custom_call.1} parent=47 // pred_fallthru
          _
      $region48: #{tpu_custom_call.1} parent=5 // pred_fallthru
        _
      %p1069 = scmp.le.s32.totalorder 2, %s21
      // Predicated region
      $region77: #{tpu_custom_call.1} parent=5 // pred_check
        %p1070 = pneg %p1069
      $region78: #{tpu_custom_call.1} parent=5 // pred_check_branch
        %1072 = sbr.rel (%p1070) target = $region80
      $region79: #{tpu_custom_call.1} parent=5 // pred_region
        %s1073 = ssub.s32 %s21, 2
        // Predicated region
        $region81: #{tpu_custom_call.1} parent=79 // pred_check
          %p1074 = pneg %p207
        $region82: #{tpu_custom_call.1} parent=79 // pred_check_branch
          %1076 = sbr.rel (%p1074) target = $region84
        $region83: #{tpu_custom_call.1} parent=79 // pred_region
          %s1077 = sand.u32 %s192, 1
          %s1078 = scalar_lea.sflag [#allocation4], %s1077
          %s1079 = sand.u32 %s192, 1
          %s1080 = smul.addr %s1079, 8
          %s1081 = scalar_lea.vmem [#allocation12], %s1080
          %1083 = dma.done %s1078, 128
        $region84: #{tpu_custom_call.1} parent=79 // pred_fallthru
          _
      $region80: #{tpu_custom_call.1} parent=5 // pred_fallthru
        _
    $region6: #{tpu_custom_call.1} parent=1 // loop_footer
      %s25 = sadd.s32 1, %s21
    $region7: #{tpu_custom_call.1} parent=1 // loop_footer_branch
      %20 = sbr.rel target = $region3
    $region8: #{tpu_custom_call.1} parent=1 // loop_exit
      _
    %1084 = vsyncpa [#allocation3], 1
    %s1085 = scalar_lea.sflag [#allocation3], 1
    %1086 = vsyncpa %s1085, 1
    %1087 = vsyncpa [#allocation6], 1
    %1088 = vsyncpa [#allocation10], 1
    %1089 = vsyncpa [#allocation4], 1
    %s1090 = scalar_lea.sflag [#allocation4], 1
    %1091 = vsyncpa %s1090, 1

</llo_original>
